<compile_context>
chip_gen: v5e
topology: v5e:2x2
jax: 0.10.0
libtpu: 0.0.40
codegen_flags: <defaults>
</compile_context>

<pallas_src>
import numpy as np
import jax
import jax.numpy as jnp
from jax.experimental import pallas as pl
from jax.experimental.pallas import tpu as pltpu

KSIZE, STRIDE, PAD = 5, 2, 2
KK = KSIZE * KSIZE
NEG_SLOPE = 0.2


def _conv_out_size(n):
    return (n + 2 * PAD - KSIZE) // STRIDE + 1


def _build_gather_matrix(h_in, w_in):
    """0/1 matrix G of shape (Sin, 25*Sout).

    For a channel-major activation a (C, Sin):  (a @ G)[c, k*Sout + so] is the
    zero-padded input pixel feeding output position `so` at kernel offset
    k = ky*5 + kx (all-zero columns implement ZeroPad2d(2)).  Built once at
    init with numpy; inside the kernel patch extraction becomes one MXU GEMM
    instead of strided VMEM gathers / XLA im2col glue.
    """
    h_out, w_out = _conv_out_size(h_in), _conv_out_size(w_in)
    s_in, s_out = h_in * w_in, h_out * w_out
    g = np.zeros((s_in, KK * s_out), np.float32)
    for ky in range(KSIZE):
        for kx in range(KSIZE):
            k = ky * KSIZE + kx
            for ho in range(h_out):
                hi = STRIDE * ho + ky - PAD
                if hi < 0 or hi >= h_in:
                    continue
                for wo in range(w_out):
                    wi = STRIDE * wo + kx - PAD
                    if wi < 0 or wi >= w_in:
                        continue
                    g[hi * w_in + wi, k * s_out + ho * w_out + wo] = 1.0
    return g, h_out, w_out


# ---------------------------------------------------------------------------
# Fused Pallas kernel: conv1 -> conv2 -> conv3 -> linear, one image per grid step
# ---------------------------------------------------------------------------
def _disc_fused_kernel(x_ref, g1_ref, w1_ref, b1_ref, g2_ref, w2_ref, b2_ref,
                       g3_ref, w3_ref, b3_ref, wl_ref, bl_ref, o_ref):
    def conv_lrelu(act_bf, g_ref, w_ref, b_ref):
        s_out = g_ref.shape[1] // KK
        # 1) im2col patch gather: one lane-dense MXU GEMM against the 0/1
        #    gather matrix (bf16 operands, exact because entries are 0/1).
        patches = jnp.dot(act_bf, g_ref[...],
                          preferred_element_type=jnp.float32)        # (Cin, 25*Sout)
        # 2) rearrange the 25 offset blocks from lanes into rows -> im2col
        #    matrix, entirely in registers/VMEM (static slices + concat).
        pieces = [patches[:, k * s_out:(k + 1) * s_out] for k in range(KK)]
        pmat = jnp.concatenate(pieces, axis=0).astype(jnp.bfloat16)   # (25*Cin, Sout)
        # 3) conv == single bf16 GEMM with the reshaped conv weight, f32 acc,
        #    bias + LeakyReLU(0.2) fused.
        acc = jnp.dot(w_ref[...], pmat,
                      preferred_element_type=jnp.float32)             # (Cout, Sout)
        acc = acc + b_ref[...]                                        # (Cout,1) bcast
        return jnp.where(acc > 0.0, acc, NEG_SLOPE * acc)

    a0 = x_ref[0]                                                     # (C, H*W) bf16
    h1 = conv_lrelu(a0, g1_ref, w1_ref, b1_ref)
    h2 = conv_lrelu(h1.astype(jnp.bfloat16), g2_ref, w2_ref, b2_ref)
    h3 = conv_lrelu(h2.astype(jnp.bfloat16), g3_ref, w3_ref, b3_ref)  # (C3, S3) f32

    # Final Linear folded into the epilogue: channel-major h3 is already in
    # torch .view(N,-1) order, so it is an elementwise multiply + full
    # reduction (VPU/XLU) -- no degenerate N=1 MXU matmul, no extra call.
    lin = jnp.sum(h3 * wl_ref[...], keepdims=True) + bl_ref[...]      # (1, 1)
    # Lane-dense (128-wide) store; wrapper slices back to (N, 1).
    o_ref[...] = (lin + jnp.zeros((1, 1, 128), jnp.float32)).astype(o_ref.dtype)


# ---------------------------------------------------------------------------
# One-time parameter preparation (all reshapes / casts hoisted out of forward)
# ---------------------------------------------------------------------------
def prepare_params(params, image_shape):
    C, H, W = image_shape
    g1, h1, w1 = _build_gather_matrix(H, W)
    g2, h2, w2 = _build_gather_matrix(h1, w1)
    g3, h3, w3 = _build_gather_matrix(h2, w2)

    def conv_w2d(w):
        # (Cout, Cin, 5, 5) -> (Cout, 25*Cin), column order (ky, kx, cin) to
        # match the in-kernel im2col row order.
        cout = w.shape[0]
        return jnp.transpose(w, (0, 2, 3, 1)).reshape(cout, -1).astype(jnp.bfloat16)

    c3 = params["w3"].shape[0]
    return {
        "g1": jnp.asarray(g1, jnp.bfloat16),
        "g2": jnp.asarray(g2, jnp.bfloat16),
        "g3": jnp.asarray(g3, jnp.bfloat16),
        "w1": conv_w2d(params["w1"]),
        "b1": params["b1"].reshape(-1, 1).astype(jnp.float32),
        "w2": conv_w2d(params["w2"]),
        "b2": params["b2"].reshape(-1, 1).astype(jnp.float32),
        "w3": conv_w2d(params["w3"]),
        "b3": params["b3"].reshape(-1, 1).astype(jnp.float32),
        # torch .view(N,-1) on NCHW flattens as (c, h, w); channel-major h3 is
        # already in that order, so the Linear weight just reshapes.
        "wl": params["wl"].reshape(c3, h3 * w3).astype(jnp.float32),
        "bl": params["bl"].reshape(1, 1).astype(jnp.float32),
    }


@jax.jit
def discriminator_forward(prep, X):
    """X: (N, C, H, W) f32 -> (N, 1) f32, one fused pallas_call."""
    N, C, H, W = X.shape
    x2 = X.reshape(N, C, H * W).astype(jnp.bfloat16)   # channel-major, free reshape

    def full2d(a):
        return pl.BlockSpec(a.shape, lambda b: (0, 0))

    order = ("g1", "w1", "b1", "g2", "w2", "b2", "g3", "w3", "b3", "wl", "bl")
    out = pl.pallas_call(
        _disc_fused_kernel,
        out_shape=jax.ShapeDtypeStruct((N, 1, 128), jnp.float32),
        grid=(N,),
        in_specs=[pl.BlockSpec((1, C, H * W), lambda b: (b, 0, 0))]
                 + [full2d(prep[k]) for k in order],
        out_specs=pl.BlockSpec((1, 1, 128), lambda b: (b, 0, 0)),
        compiler_params=pltpu.CompilerParams(
            dimension_semantics=("parallel",),          # shard batch across TCs
            vmem_limit_bytes=32 * 1024 * 1024),         # explicit, fits v7x too
    )(x2, *[prep[k] for k in order])
    return out[:, 0, :1]


# ---------------------------------------------------------------------------
# Parameter init (PyTorch-shaped) and pure-JAX reference for validation
# ---------------------------------------------------------------------------
def init_params(key, image_shape=(3, 16, 16), dim_factor=8):
    C, H, W = image_shape
    assert H % 8 == 0 and W % 8 == 0
    H_out, W_out = H // 8, W // 8
    ks = jax.random.split(key, 8)
    s = 0.05
    return {
        "w1": s * jax.random.normal(ks[0], (dim_factor, C, 5, 5), jnp.float32),
        "b1": s * jax.random.normal(ks[1], (dim_factor,), jnp.float32),
        "w2": s * jax.random.normal(ks[2], (2 * dim_factor, dim_factor, 5, 5), jnp.float32),
        "b2": s * jax.random.normal(ks[3], (2 * dim_factor,), jnp.float32),
        "w3": s * jax.random.normal(ks[4], (4 * dim_factor, 2 * dim_factor, 5, 5), jnp.float32),
        "b3": s * jax.random.normal(ks[5], (4 * dim_factor,), jnp.float32),
        "wl": s * jax.random.normal(ks[6], (1, 4 * dim_factor * H_out * W_out), jnp.float32),
        "bl": s * jax.random.normal(ks[7], (1,), jnp.float32),
    }


def reference_forward(params, X):
    def conv(x, w, b):
        y = jax.lax.conv_general_dilated(
            x, w, window_strides=(2, 2), padding=((2, 2), (2, 2)),
            dimension_numbers=("NCHW", "OIHW", "NCHW"))
        y = y + b.reshape(1, -1, 1, 1)
        return jnp.where(y > 0, y, 0.2 * y)
    h1 = conv(X, params["w1"], params["b1"])
    h2 = conv(h1, params["w2"], params["b2"])
    h3 = conv(h2, params["w3"], params["b3"])
    flat = h3.reshape(h3.shape[0], -1)
    return flat @ params["wl"].T + params["bl"]


if __name__ == "__main__":
    key = jax.random.PRNGKey(0)
    k_param, k_x = jax.random.split(key)

    image_shape = (3, 16, 16)   # (C, H, W), H and W divisible by 2**3
    dim_factor = 8
    batch = 2

    params = init_params(k_param, image_shape=image_shape, dim_factor=dim_factor)
    prep = prepare_params(params, image_shape)
    X = jax.random.normal(k_x, (batch,) + image_shape, jnp.float32)

    out = jax.block_until_ready(discriminator_forward(prep, X))
    assert out.shape == (batch, 1), out.shape

    ref = jax.block_until_ready(reference_forward(params, X))
    np.testing.assert_allclose(np.asarray(out), np.asarray(ref), rtol=5e-2, atol=5e-2)

    print("KERNEL_OK")
</pallas_src>

<mosaic_0001>
module attributes {stable_mosaic.version = 11 : i64} {
  func.func @_disc_fused_kernel(%arg0: i32, %arg1: memref<1x3x256xbf16, #tpu.memory_space<vmem>>, %arg2: memref<256x1600xbf16, #tpu.memory_space<vmem>>, %arg3: memref<8x75xbf16, #tpu.memory_space<vmem>>, %arg4: memref<8x1xf32, #tpu.memory_space<vmem>>, %arg5: memref<64x400xbf16, #tpu.memory_space<vmem>>, %arg6: memref<16x200xbf16, #tpu.memory_space<vmem>>, %arg7: memref<16x1xf32, #tpu.memory_space<vmem>>, %arg8: memref<16x100xbf16, #tpu.memory_space<vmem>>, %arg9: memref<32x400xbf16, #tpu.memory_space<vmem>>, %arg10: memref<32x1xf32, #tpu.memory_space<vmem>>, %arg11: memref<32x4xf32, #tpu.memory_space<vmem>>, %arg12: memref<1x1xf32, #tpu.memory_space<vmem>>, %arg13: memref<1x1x128xf32, #tpu.memory_space<vmem>>) attributes {dimension_semantics = [#tpu.dimension_semantics<parallel>], iteration_bounds = array<i64: 2>, scalar_prefetch = 0 : i64, scratch_operands = 0 : i64, tpu.core_type = #tpu.core_type<tc>, window_params = [{transform_indices = @transform_0, window_bounds = array<i64: 1, 3, 256>}, {pipeline_mode = #tpu.pipeline_mode<synchronous>, transform_indices = @transform_1, window_bounds = array<i64: 256, 1600>}, {pipeline_mode = #tpu.pipeline_mode<synchronous>, transform_indices = @transform_2, window_bounds = array<i64: 8, 75>}, {pipeline_mode = #tpu.pipeline_mode<synchronous>, transform_indices = @transform_3, window_bounds = array<i64: 8, 1>}, {pipeline_mode = #tpu.pipeline_mode<synchronous>, transform_indices = @transform_4, window_bounds = array<i64: 64, 400>}, {pipeline_mode = #tpu.pipeline_mode<synchronous>, transform_indices = @transform_5, window_bounds = array<i64: 16, 200>}, {pipeline_mode = #tpu.pipeline_mode<synchronous>, transform_indices = @transform_6, window_bounds = array<i64: 16, 1>}, {pipeline_mode = #tpu.pipeline_mode<synchronous>, transform_indices = @transform_7, window_bounds = array<i64: 16, 100>}, {pipeline_mode = #tpu.pipeline_mode<synchronous>, transform_indices = @transform_8, window_bounds = array<i64: 32, 400>}, {pipeline_mode = #tpu.pipeline_mode<synchronous>, transform_indices = @transform_9, window_bounds = array<i64: 32, 1>}, {pipeline_mode = #tpu.pipeline_mode<synchronous>, transform_indices = @transform_10, window_bounds = array<i64: 32, 4>}, {pipeline_mode = #tpu.pipeline_mode<synchronous>, transform_indices = @transform_11, window_bounds = array<i64: 1, 1>}, {transform_indices = @transform_12, window_bounds = array<i64: 1, 1, 128>}]} {
    %c0 = arith.constant 0 : index
    %c0_0 = arith.constant 0 : index
    %c0_1 = arith.constant 0 : index
    %0 = vector.load %arg1[%c0, %c0_0, %c0_1] : memref<1x3x256xbf16, #tpu.memory_space<vmem>>, vector<1x3x256xbf16>
    %1 = vector.shape_cast %0 : vector<1x3x256xbf16> to vector<3x256xbf16>
    %c0_2 = arith.constant 0 : index
    %c0_3 = arith.constant 0 : index
    %2 = vector.load %arg2[%c0_2, %c0_3] : memref<256x1600xbf16, #tpu.memory_space<vmem>>, vector<256x1600xbf16>
    %cst = arith.constant dense<0.000000e+00> : vector<3x1600xf32>
    %3 = tpu.matmul %1, %2, %cst {dimension_numbers = #tpu.dot_dimension_numbers<[1], [0], [0], [1], [0, 0, 1, 1], [], []>} : vector<3x256xbf16>, vector<256x1600xbf16>, vector<3x1600xf32> -> vector<3x1600xf32>
    %4 = vector.extract_strided_slice %3 {offsets = [0, 0], sizes = [3, 64], strides = [1, 1]} : vector<3x1600xf32> to vector<3x64xf32>
    %5 = vector.extract_strided_slice %3 {offsets = [0, 64], sizes = [3, 64], strides = [1, 1]} : vector<3x1600xf32> to vector<3x64xf32>
    %6 = vector.extract_strided_slice %3 {offsets = [0, 128], sizes = [3, 64], strides = [1, 1]} : vector<3x1600xf32> to vector<3x64xf32>
    %7 = vector.extract_strided_slice %3 {offsets = [0, 192], sizes = [3, 64], strides = [1, 1]} : vector<3x1600xf32> to vector<3x64xf32>
    %8 = vector.extract_strided_slice %3 {offsets = [0, 256], sizes = [3, 64], strides = [1, 1]} : vector<3x1600xf32> to vector<3x64xf32>
    %9 = vector.extract_strided_slice %3 {offsets = [0, 320], sizes = [3, 64], strides = [1, 1]} : vector<3x1600xf32> to vector<3x64xf32>
    %10 = vector.extract_strided_slice %3 {offsets = [0, 384], sizes = [3, 64], strides = [1, 1]} : vector<3x1600xf32> to vector<3x64xf32>
    %11 = vector.extract_strided_slice %3 {offsets = [0, 448], sizes = [3, 64], strides = [1, 1]} : vector<3x1600xf32> to vector<3x64xf32>
    %12 = vector.extract_strided_slice %3 {offsets = [0, 512], sizes = [3, 64], strides = [1, 1]} : vector<3x1600xf32> to vector<3x64xf32>
    %13 = vector.extract_strided_slice %3 {offsets = [0, 576], sizes = [3, 64], strides = [1, 1]} : vector<3x1600xf32> to vector<3x64xf32>
    %14 = vector.extract_strided_slice %3 {offsets = [0, 640], sizes = [3, 64], strides = [1, 1]} : vector<3x1600xf32> to vector<3x64xf32>
    %15 = vector.extract_strided_slice %3 {offsets = [0, 704], sizes = [3, 64], strides = [1, 1]} : vector<3x1600xf32> to vector<3x64xf32>
    %16 = vector.extract_strided_slice %3 {offsets = [0, 768], sizes = [3, 64], strides = [1, 1]} : vector<3x1600xf32> to vector<3x64xf32>
    %17 = vector.extract_strided_slice %3 {offsets = [0, 832], sizes = [3, 64], strides = [1, 1]} : vector<3x1600xf32> to vector<3x64xf32>
    %18 = vector.extract_strided_slice %3 {offsets = [0, 896], sizes = [3, 64], strides = [1, 1]} : vector<3x1600xf32> to vector<3x64xf32>
    %19 = vector.extract_strided_slice %3 {offsets = [0, 960], sizes = [3, 64], strides = [1, 1]} : vector<3x1600xf32> to vector<3x64xf32>
    %20 = vector.extract_strided_slice %3 {offsets = [0, 1024], sizes = [3, 64], strides = [1, 1]} : vector<3x1600xf32> to vector<3x64xf32>
    %21 = vector.extract_strided_slice %3 {offsets = [0, 1088], sizes = [3, 64], strides = [1, 1]} : vector<3x1600xf32> to vector<3x64xf32>
    %22 = vector.extract_strided_slice %3 {offsets = [0, 1152], sizes = [3, 64], strides = [1, 1]} : vector<3x1600xf32> to vector<3x64xf32>
    %23 = vector.extract_strided_slice %3 {offsets = [0, 1216], sizes = [3, 64], strides = [1, 1]} : vector<3x1600xf32> to vector<3x64xf32>
    %24 = vector.extract_strided_slice %3 {offsets = [0, 1280], sizes = [3, 64], strides = [1, 1]} : vector<3x1600xf32> to vector<3x64xf32>
    %25 = vector.extract_strided_slice %3 {offsets = [0, 1344], sizes = [3, 64], strides = [1, 1]} : vector<3x1600xf32> to vector<3x64xf32>
    %26 = vector.extract_strided_slice %3 {offsets = [0, 1408], sizes = [3, 64], strides = [1, 1]} : vector<3x1600xf32> to vector<3x64xf32>
    %27 = vector.extract_strided_slice %3 {offsets = [0, 1472], sizes = [3, 64], strides = [1, 1]} : vector<3x1600xf32> to vector<3x64xf32>
    %28 = vector.extract_strided_slice %3 {offsets = [0, 1536], sizes = [3, 64], strides = [1, 1]} : vector<3x1600xf32> to vector<3x64xf32>
    %29 = tpu.concatenate %4, %5, %6, %7, %8, %9, %10, %11, %12, %13, %14, %15, %16, %17, %18, %19 in 0 : vector<3x64xf32>, vector<3x64xf32>, vector<3x64xf32>, vector<3x64xf32>, vector<3x64xf32>, vector<3x64xf32>, vector<3x64xf32>, vector<3x64xf32>, vector<3x64xf32>, vector<3x64xf32>, vector<3x64xf32>, vector<3x64xf32>, vector<3x64xf32>, vector<3x64xf32>, vector<3x64xf32>, vector<3x64xf32> -> vector<48x64xf32>
    %30 = tpu.concatenate %20, %21, %22, %23, %24, %25, %26, %27, %28 in 0 : vector<3x64xf32>, vector<3x64xf32>, vector<3x64xf32>, vector<3x64xf32>, vector<3x64xf32>, vector<3x64xf32>, vector<3x64xf32>, vector<3x64xf32>, vector<3x64xf32> -> vector<27x64xf32>
    %31 = tpu.concatenate %29, %30 in 0 : vector<48x64xf32>, vector<27x64xf32> -> vector<75x64xf32>
    %32 = arith.truncf %31 : vector<75x64xf32> to vector<75x64xbf16>
    %c0_4 = arith.constant 0 : index
    %c0_5 = arith.constant 0 : index
    %33 = vector.load %arg3[%c0_4, %c0_5] : memref<8x75xbf16, #tpu.memory_space<vmem>>, vector<8x75xbf16>
    %cst_6 = arith.constant dense<0.000000e+00> : vector<8x64xf32>
    %34 = tpu.matmul %33, %32, %cst_6 {dimension_numbers = #tpu.dot_dimension_numbers<[1], [0], [0], [1], [0, 0, 1, 1], [], []>} : vector<8x75xbf16>, vector<75x64xbf16>, vector<8x64xf32> -> vector<8x64xf32>
    %c0_7 = arith.constant 0 : index
    %c0_8 = arith.constant 0 : index
    %35 = vector.load %arg4[%c0_7, %c0_8] : memref<8x1xf32, #tpu.memory_space<vmem>>, vector<8x1xf32>
    %36 = vector.broadcast %35 : vector<8x1xf32> to vector<8x64xf32>
    %37 = arith.addf %34, %36 : vector<8x64xf32>
    %cst_9 = arith.constant 0.000000e+00 : f32
    %38 = vector.broadcast %cst_9 : f32 to vector<8x64xf32>
    %39 = arith.cmpf ogt, %37, %38 : vector<8x64xf32>
    %cst_10 = arith.constant 2.000000e-01 : f32
    %40 = vector.broadcast %cst_10 : f32 to vector<8x64xf32>
    %41 = arith.mulf %40, %37 : vector<8x64xf32>
    %42 = arith.select %39, %37, %41 : vector<8x64xi1>, vector<8x64xf32>
    %43 = arith.truncf %42 : vector<8x64xf32> to vector<8x64xbf16>
    %c0_11 = arith.constant 0 : index
    %c0_12 = arith.constant 0 : index
    %44 = vector.load %arg5[%c0_11, %c0_12] : memref<64x400xbf16, #tpu.memory_space<vmem>>, vector<64x400xbf16>
    %cst_13 = arith.constant dense<0.000000e+00> : vector<8x400xf32>
    %45 = tpu.matmul %43, %44, %cst_13 {dimension_numbers = #tpu.dot_dimension_numbers<[1], [0], [0], [1], [0, 0, 1, 1], [], []>} : vector<8x64xbf16>, vector<64x400xbf16>, vector<8x400xf32> -> vector<8x400xf32>
    %46 = vector.extract_strided_slice %45 {offsets = [0, 0], sizes = [8, 16], strides = [1, 1]} : vector<8x400xf32> to vector<8x16xf32>
    %47 = vector.extract_strided_slice %45 {offsets = [0, 16], sizes = [8, 16], strides = [1, 1]} : vector<8x400xf32> to vector<8x16xf32>
    %48 = vector.extract_strided_slice %45 {offsets = [0, 32], sizes = [8, 16], strides = [1, 1]} : vector<8x400xf32> to vector<8x16xf32>
    %49 = vector.extract_strided_slice %45 {offsets = [0, 48], sizes = [8, 16], strides = [1, 1]} : vector<8x400xf32> to vector<8x16xf32>
    %50 = vector.extract_strided_slice %45 {offsets = [0, 64], sizes = [8, 16], strides = [1, 1]} : vector<8x400xf32> to vector<8x16xf32>
    %51 = vector.extract_strided_slice %45 {offsets = [0, 80], sizes = [8, 16], strides = [1, 1]} : vector<8x400xf32> to vector<8x16xf32>
    %52 = vector.extract_strided_slice %45 {offsets = [0, 96], sizes = [8, 16], strides = [1, 1]} : vector<8x400xf32> to vector<8x16xf32>
    %53 = vector.extract_strided_slice %45 {offsets = [0, 112], sizes = [8, 16], strides = [1, 1]} : vector<8x400xf32> to vector<8x16xf32>
    %54 = vector.extract_strided_slice %45 {offsets = [0, 128], sizes = [8, 16], strides = [1, 1]} : vector<8x400xf32> to vector<8x16xf32>
    %55 = vector.extract_strided_slice %45 {offsets = [0, 144], sizes = [8, 16], strides = [1, 1]} : vector<8x400xf32> to vector<8x16xf32>
    %56 = vector.extract_strided_slice %45 {offsets = [0, 160], sizes = [8, 16], strides = [1, 1]} : vector<8x400xf32> to vector<8x16xf32>
    %57 = vector.extract_strided_slice %45 {offsets = [0, 176], sizes = [8, 16], strides = [1, 1]} : vector<8x400xf32> to vector<8x16xf32>
    %58 = vector.extract_strided_slice %45 {offsets = [0, 192], sizes = [8, 16], strides = [1, 1]} : vector<8x400xf32> to vector<8x16xf32>
    %59 = vector.extract_strided_slice %45 {offsets = [0, 208], sizes = [8, 16], strides = [1, 1]} : vector<8x400xf32> to vector<8x16xf32>
    %60 = vector.extract_strided_slice %45 {offsets = [0, 224], sizes = [8, 16], strides = [1, 1]} : vector<8x400xf32> to vector<8x16xf32>
    %61 = vector.extract_strided_slice %45 {offsets = [0, 240], sizes = [8, 16], strides = [1, 1]} : vector<8x400xf32> to vector<8x16xf32>
    %62 = vector.extract_strided_slice %45 {offsets = [0, 256], sizes = [8, 16], strides = [1, 1]} : vector<8x400xf32> to vector<8x16xf32>
    %63 = vector.extract_strided_slice %45 {offsets = [0, 272], sizes = [8, 16], strides = [1, 1]} : vector<8x400xf32> to vector<8x16xf32>
    %64 = vector.extract_strided_slice %45 {offsets = [0, 288], sizes = [8, 16], strides = [1, 1]} : vector<8x400xf32> to vector<8x16xf32>
    %65 = vector.extract_strided_slice %45 {offsets = [0, 304], sizes = [8, 16], strides = [1, 1]} : vector<8x400xf32> to vector<8x16xf32>
    %66 = vector.extract_strided_slice %45 {offsets = [0, 320], sizes = [8, 16], strides = [1, 1]} : vector<8x400xf32> to vector<8x16xf32>
    %67 = vector.extract_strided_slice %45 {offsets = [0, 336], sizes = [8, 16], strides = [1, 1]} : vector<8x400xf32> to vector<8x16xf32>
    %68 = vector.extract_strided_slice %45 {offsets = [0, 352], sizes = [8, 16], strides = [1, 1]} : vector<8x400xf32> to vector<8x16xf32>
    %69 = vector.extract_strided_slice %45 {offsets = [0, 368], sizes = [8, 16], strides = [1, 1]} : vector<8x400xf32> to vector<8x16xf32>
    %70 = vector.extract_strided_slice %45 {offsets = [0, 384], sizes = [8, 16], strides = [1, 1]} : vector<8x400xf32> to vector<8x16xf32>
    %71 = tpu.concatenate %46, %47, %48, %49, %50, %51, %52, %53, %54, %55, %56, %57, %58, %59, %60, %61 in 0 : vector<8x16xf32>, vector<8x16xf32>, vector<8x16xf32>, vector<8x16xf32>, vector<8x16xf32>, vector<8x16xf32>, vector<8x16xf32>, vector<8x16xf32>, vector<8x16xf32>, vector<8x16xf32>, vector<8x16xf32>, vector<8x16xf32>, vector<8x16xf32>, vector<8x16xf32>, vector<8x16xf32>, vector<8x16xf32> -> vector<128x16xf32>
    %72 = tpu.concatenate %62, %63, %64, %65, %66, %67, %68, %69, %70 in 0 : vector<8x16xf32>, vector<8x16xf32>, vector<8x16xf32>, vector<8x16xf32>, vector<8x16xf32>, vector<8x16xf32>, vector<8x16xf32>, vector<8x16xf32>, vector<8x16xf32> -> vector<72x16xf32>
    %73 = tpu.concatenate %71, %72 in 0 : vector<128x16xf32>, vector<72x16xf32> -> vector<200x16xf32>
    %74 = arith.truncf %73 : vector<200x16xf32> to vector<200x16xbf16>
    %c0_14 = arith.constant 0 : index
    %c0_15 = arith.constant 0 : index
    %75 = vector.load %arg6[%c0_14, %c0_15] : memref<16x200xbf16, #tpu.memory_space<vmem>>, vector<16x200xbf16>
    %cst_16 = arith.constant dense<0.000000e+00> : vector<16x16xf32>
    %76 = tpu.matmul %75, %74, %cst_16 {dimension_numbers = #tpu.dot_dimension_numbers<[1], [0], [0], [1], [0, 0, 1, 1], [], []>} : vector<16x200xbf16>, vector<200x16xbf16>, vector<16x16xf32> -> vector<16x16xf32>
    %c0_17 = arith.constant 0 : index
    %c0_18 = arith.constant 0 : index
    %77 = vector.load %arg7[%c0_17, %c0_18] : memref<16x1xf32, #tpu.memory_space<vmem>>, vector<16x1xf32>
    %78 = vector.broadcast %77 : vector<16x1xf32> to vector<16x16xf32>
    %79 = arith.addf %76, %78 : vector<16x16xf32>
    %cst_19 = arith.constant 0.000000e+00 : f32
    %80 = vector.broadcast %cst_19 : f32 to vector<16x16xf32>
    %81 = arith.cmpf ogt, %79, %80 : vector<16x16xf32>
    %cst_20 = arith.constant 2.000000e-01 : f32
    %82 = vector.broadcast %cst_20 : f32 to vector<16x16xf32>
    %83 = arith.mulf %82, %79 : vector<16x16xf32>
    %84 = arith.select %81, %79, %83 : vector<16x16xi1>, vector<16x16xf32>
    %85 = arith.truncf %84 : vector<16x16xf32> to vector<16x16xbf16>
    %c0_21 = arith.constant 0 : index
    %c0_22 = arith.constant 0 : index
    %86 = vector.load %arg8[%c0_21, %c0_22] : memref<16x100xbf16, #tpu.memory_space<vmem>>, vector<16x100xbf16>
    %cst_23 = arith.constant dense<0.000000e+00> : vector<16x100xf32>
    %87 = tpu.matmul %85, %86, %cst_23 {dimension_numbers = #tpu.dot_dimension_numbers<[1], [0], [0], [1], [0, 0, 1, 1], [], []>} : vector<16x16xbf16>, vector<16x100xbf16>, vector<16x100xf32> -> vector<16x100xf32>
    %88 = vector.extract_strided_slice %87 {offsets = [0, 0], sizes = [16, 4], strides = [1, 1]} : vector<16x100xf32> to vector<16x4xf32>
    %89 = vector.extract_strided_slice %87 {offsets = [0, 4], sizes = [16, 4], strides = [1, 1]} : vector<16x100xf32> to vector<16x4xf32>
    %90 = vector.extract_strided_slice %87 {offsets = [0, 8], sizes = [16, 4], strides = [1, 1]} : vector<16x100xf32> to vector<16x4xf32>
    %91 = vector.extract_strided_slice %87 {offsets = [0, 12], sizes = [16, 4], strides = [1, 1]} : vector<16x100xf32> to vector<16x4xf32>
    %92 = vector.extract_strided_slice %87 {offsets = [0, 16], sizes = [16, 4], strides = [1, 1]} : vector<16x100xf32> to vector<16x4xf32>
    %93 = vector.extract_strided_slice %87 {offsets = [0, 20], sizes = [16, 4], strides = [1, 1]} : vector<16x100xf32> to vector<16x4xf32>
    %94 = vector.extract_strided_slice %87 {offsets = [0, 24], sizes = [16, 4], strides = [1, 1]} : vector<16x100xf32> to vector<16x4xf32>
    %95 = vector.extract_strided_slice %87 {offsets = [0, 28], sizes = [16, 4], strides = [1, 1]} : vector<16x100xf32> to vector<16x4xf32>
    %96 = vector.extract_strided_slice %87 {offsets = [0, 32], sizes = [16, 4], strides = [1, 1]} : vector<16x100xf32> to vector<16x4xf32>
    %97 = vector.extract_strided_slice %87 {offsets = [0, 36], sizes = [16, 4], strides = [1, 1]} : vector<16x100xf32> to vector<16x4xf32>
    %98 = vector.extract_strided_slice %87 {offsets = [0, 40], sizes = [16, 4], strides = [1, 1]} : vector<16x100xf32> to vector<16x4xf32>
    %99 = vector.extract_strided_slice %87 {offsets = [0, 44], sizes = [16, 4], strides = [1, 1]} : vector<16x100xf32> to vector<16x4xf32>
    %100 = vector.extract_strided_slice %87 {offsets = [0, 48], sizes = [16, 4], strides = [1, 1]} : vector<16x100xf32> to vector<16x4xf32>
    %101 = vector.extract_strided_slice %87 {offsets = [0, 52], sizes = [16, 4], strides = [1, 1]} : vector<16x100xf32> to vector<16x4xf32>
    %102 = vector.extract_strided_slice %87 {offsets = [0, 56], sizes = [16, 4], strides = [1, 1]} : vector<16x100xf32> to vector<16x4xf32>
    %103 = vector.extract_strided_slice %87 {offsets = [0, 60], sizes = [16, 4], strides = [1, 1]} : vector<16x100xf32> to vector<16x4xf32>
    %104 = vector.extract_strided_slice %87 {offsets = [0, 64], sizes = [16, 4], strides = [1, 1]} : vector<16x100xf32> to vector<16x4xf32>
    %105 = vector.extract_strided_slice %87 {offsets = [0, 68], sizes = [16, 4], strides = [1, 1]} : vector<16x100xf32> to vector<16x4xf32>
    %106 = vector.extract_strided_slice %87 {offsets = [0, 72], sizes = [16, 4], strides = [1, 1]} : vector<16x100xf32> to vector<16x4xf32>
    %107 = vector.extract_strided_slice %87 {offsets = [0, 76], sizes = [16, 4], strides = [1, 1]} : vector<16x100xf32> to vector<16x4xf32>
    %108 = vector.extract_strided_slice %87 {offsets = [0, 80], sizes = [16, 4], strides = [1, 1]} : vector<16x100xf32> to vector<16x4xf32>
    %109 = vector.extract_strided_slice %87 {offsets = [0, 84], sizes = [16, 4], strides = [1, 1]} : vector<16x100xf32> to vector<16x4xf32>
    %110 = vector.extract_strided_slice %87 {offsets = [0, 88], sizes = [16, 4], strides = [1, 1]} : vector<16x100xf32> to vector<16x4xf32>
    %111 = vector.extract_strided_slice %87 {offsets = [0, 92], sizes = [16, 4], strides = [1, 1]} : vector<16x100xf32> to vector<16x4xf32>
    %112 = vector.extract_strided_slice %87 {offsets = [0, 96], sizes = [16, 4], strides = [1, 1]} : vector<16x100xf32> to vector<16x4xf32>
    %113 = tpu.concatenate %88, %89, %90, %91, %92, %93, %94, %95, %96, %97, %98, %99, %100, %101, %102, %103 in 0 : vector<16x4xf32>, vector<16x4xf32>, vector<16x4xf32>, vector<16x4xf32>, vector<16x4xf32>, vector<16x4xf32>, vector<16x4xf32>, vector<16x4xf32>, vector<16x4xf32>, vector<16x4xf32>, vector<16x4xf32>, vector<16x4xf32>, vector<16x4xf32>, vector<16x4xf32>, vector<16x4xf32>, vector<16x4xf32> -> vector<256x4xf32>
    %114 = tpu.concatenate %104, %105, %106, %107, %108, %109, %110, %111, %112 in 0 : vector<16x4xf32>, vector<16x4xf32>, vector<16x4xf32>, vector<16x4xf32>, vector<16x4xf32>, vector<16x4xf32>, vector<16x4xf32>, vector<16x4xf32>, vector<16x4xf32> -> vector<144x4xf32>
    %115 = tpu.concatenate %113, %114 in 0 : vector<256x4xf32>, vector<144x4xf32> -> vector<400x4xf32>
    %116 = arith.truncf %115 : vector<400x4xf32> to vector<400x4xbf16>
    %c0_24 = arith.constant 0 : index
    %c0_25 = arith.constant 0 : index
    %117 = vector.load %arg9[%c0_24, %c0_25] : memref<32x400xbf16, #tpu.memory_space<vmem>>, vector<32x400xbf16>
    %cst_26 = arith.constant dense<0.000000e+00> : vector<32x4xf32>
    %118 = tpu.matmul %117, %116, %cst_26 {dimension_numbers = #tpu.dot_dimension_numbers<[1], [0], [0], [1], [0, 0, 1, 1], [], []>} : vector<32x400xbf16>, vector<400x4xbf16>, vector<32x4xf32> -> vector<32x4xf32>
    %c0_27 = arith.constant 0 : index
    %c0_28 = arith.constant 0 : index
    %119 = vector.load %arg10[%c0_27, %c0_28] : memref<32x1xf32, #tpu.memory_space<vmem>>, vector<32x1xf32>
    %120 = vector.broadcast %119 : vector<32x1xf32> to vector<32x4xf32>
    %121 = arith.addf %118, %120 : vector<32x4xf32>
    %cst_29 = arith.constant 0.000000e+00 : f32
    %122 = vector.broadcast %cst_29 : f32 to vector<32x4xf32>
    %123 = arith.cmpf ogt, %121, %122 : vector<32x4xf32>
    %cst_30 = arith.constant 2.000000e-01 : f32
    %124 = vector.broadcast %cst_30 : f32 to vector<32x4xf32>
    %125 = arith.mulf %124, %121 : vector<32x4xf32>
    %126 = arith.select %123, %121, %125 : vector<32x4xi1>, vector<32x4xf32>
    %c0_31 = arith.constant 0 : index
    %c0_32 = arith.constant 0 : index
    %127 = vector.load %arg11[%c0_31, %c0_32] : memref<32x4xf32, #tpu.memory_space<vmem>>, vector<32x4xf32>
    %128 = arith.mulf %126, %127 : vector<32x4xf32>
    %129 = vector.shape_cast %128 : vector<32x4xf32> to vector<1x32x4xf32>
    %cst_33 = arith.constant dense<0.000000e+00> : vector<1xf32>
    %130 = vector.multi_reduction <add>, %129, %cst_33 [1, 2] : vector<1x32x4xf32> to vector<1xf32>
    %131 = vector.shape_cast %130 : vector<1xf32> to vector<1x1x1xf32>
    %132 = vector.extract %131[0, 0, 0] : f32 from vector<1x1x1xf32>
    %133 = vector.broadcast %132 : f32 to vector<1x1xf32>
    %c0_34 = arith.constant 0 : index
    %c0_35 = arith.constant 0 : index
    %134 = vector.load %arg12[%c0_34, %c0_35] : memref<1x1xf32, #tpu.memory_space<vmem>>, vector<1x1xf32>
    %135 = arith.addf %133, %134 : vector<1x1xf32>
    %cst_36 = arith.constant 0.000000e+00 : f32
    %136 = vector.broadcast %cst_36 : f32 to vector<1x1x128xf32>
    %137 = vector.shape_cast %135 : vector<1x1xf32> to vector<1x1x1xf32>
    %138 = vector.broadcast %137 : vector<1x1x1xf32> to vector<1x1x128xf32>
    %139 = arith.addf %138, %136 : vector<1x1x128xf32>
    %c0_37 = arith.constant 0 : index
    %c0_38 = arith.constant 0 : index
    %c0_39 = arith.constant 0 : index
    %140 = vector.load %arg13[%c0_37, %c0_38, %c0_39] : memref<1x1x128xf32, #tpu.memory_space<vmem>>, vector<1x1x128xf32>
    tpu.vector_store %arg13[%c0_37, %c0_38, %c0_39], %139 {strides = array<i32>} : memref<1x1x128xf32, #tpu.memory_space<vmem>>, vector<1x1x128xf32>,
    return
  }
  func.func @transform_0(%arg0: i32) -> (i32, i32, i32) {
    %c0_i32 = arith.constant 0 : i32
    %c0_i32_0 = arith.constant 0 : i32
    %c0_i32_1 = arith.constant 0 : i32
    return %arg0, %c0_i32, %c0_i32_0 : i32, i32, i32
  }
  func.func @transform_1(%arg0: i32) -> (i32, i32) {
    %c0_i32 = arith.constant 0 : i32
    %c0_i32_0 = arith.constant 0 : i32
    %c0_i32_1 = arith.constant 0 : i32
    return %c0_i32, %c0_i32_0 : i32, i32
  }
  func.func @transform_2(%arg0: i32) -> (i32, i32) {
    %c0_i32 = arith.constant 0 : i32
    %c0_i32_0 = arith.constant 0 : i32
    %c0_i32_1 = arith.constant 0 : i32
    return %c0_i32, %c0_i32_0 : i32, i32
  }
  func.func @transform_3(%arg0: i32) -> (i32, i32) {
    %c0_i32 = arith.constant 0 : i32
    %c0_i32_0 = arith.constant 0 : i32
    %c0_i32_1 = arith.constant 0 : i32
    return %c0_i32, %c0_i32_0 : i32, i32
  }
  func.func @transform_4(%arg0: i32) -> (i32, i32) {
    %c0_i32 = arith.constant 0 : i32
    %c0_i32_0 = arith.constant 0 : i32
    %c0_i32_1 = arith.constant 0 : i32
    return %c0_i32, %c0_i32_0 : i32, i32
  }
  func.func @transform_5(%arg0: i32) -> (i32, i32) {
    %c0_i32 = arith.constant 0 : i32
    %c0_i32_0 = arith.constant 0 : i32
    %c0_i32_1 = arith.constant 0 : i32
    return %c0_i32, %c0_i32_0 : i32, i32
  }
  func.func @transform_6(%arg0: i32) -> (i32, i32) {
    %c0_i32 = arith.constant 0 : i32
    %c0_i32_0 = arith.constant 0 : i32
    %c0_i32_1 = arith.constant 0 : i32
    return %c0_i32, %c0_i32_0 : i32, i32
  }
  func.func @transform_7(%arg0: i32) -> (i32, i32) {
    %c0_i32 = arith.constant 0 : i32
    %c0_i32_0 = arith.constant 0 : i32
    %c0_i32_1 = arith.constant 0 : i32
    return %c0_i32, %c0_i32_0 : i32, i32
  }
  func.func @transform_8(%arg0: i32) -> (i32, i32) {
    %c0_i32 = arith.constant 0 : i32
    %c0_i32_0 = arith.constant 0 : i32
    %c0_i32_1 = arith.constant 0 : i32
    return %c0_i32, %c0_i32_0 : i32, i32
  }
  func.func @transform_9(%arg0: i32) -> (i32, i32) {
    %c0_i32 = arith.constant 0 : i32
    %c0_i32_0 = arith.constant 0 : i32
    %c0_i32_1 = arith.constant 0 : i32
    return %c0_i32, %c0_i32_0 : i32, i32
  }
  func.func @transform_10(%arg0: i32) -> (i32, i32) {
    %c0_i32 = arith.constant 0 : i32
    %c0_i32_0 = arith.constant 0 : i32
    %c0_i32_1 = arith.constant 0 : i32
    return %c0_i32, %c0_i32_0 : i32, i32
  }
  func.func @transform_11(%arg0: i32) -> (i32, i32) {
    %c0_i32 = arith.constant 0 : i32
    %c0_i32_0 = arith.constant 0 : i32
    %c0_i32_1 = arith.constant 0 : i32
    return %c0_i32, %c0_i32_0 : i32, i32
  }
  func.func @transform_12(%arg0: i32) -> (i32, i32, i32) {
    %c0_i32 = arith.constant 0 : i32
    %c0_i32_0 = arith.constant 0 : i32
    %c0_i32_1 = arith.constant 0 : i32
    return %arg0, %c0_i32, %c0_i32_0 : i32, i32, i32
  }
}

</mosaic_0001>

<llo_original>
// kernel: discriminator_forward.1
$region0: #{discriminator_forward.1}
  #allocation0 [shape = 'u32[]', space=smem, size = 0x4, offset = 0x4, fixed_abs, tag = 'smem constant byte address 0x4 - core index']
  #allocation1 [shape = 'u32[72,128]{1,0:T(1,128)}', space=vmem, size = 0x9000, scoped, tag = 'internal scratch']
  #allocation2 [shape = 'f32[1,1]{1,0:T(1,128)S(1)}', space=vmem, size = 0x200, scoped, tag = 'scoped memory for discriminator_forward.1']
  %s0 = inlined_call_operand.vmem [shape: bf16[2,3,256], index: 0, kind: input, shape index: {}]
  %s1 = inlined_call_operand.vmem [shape: bf16[256,1600], index: 1, kind: input, shape index: {}]
  %s2 = inlined_call_operand.vmem [shape: bf16[8,75], index: 2, kind: input, shape index: {}]
  %s3 = inlined_call_operand.vmem [shape: f32[8,1], index: 3, kind: input, shape index: {}]
  %s4 = inlined_call_operand.vmem [shape: bf16[64,400], index: 4, kind: input, shape index: {}]
  %s5 = inlined_call_operand.vmem [shape: bf16[16,200], index: 5, kind: input, shape index: {}]
  %s6 = inlined_call_operand.vmem [shape: f32[16,1], index: 6, kind: input, shape index: {}]
  %s7 = inlined_call_operand.vmem [shape: bf16[16,100], index: 7, kind: input, shape index: {}]
  %s8 = inlined_call_operand.vmem [shape: bf16[32,400], index: 8, kind: input, shape index: {}]
  %s9 = inlined_call_operand.vmem [shape: f32[32,1], index: 9, kind: input, shape index: {}]
  %s10 = inlined_call_operand.vmem [shape: f32[32,4], index: 10, kind: input, shape index: {}]
  %s11 = inlined_call_operand.<no memory space> [shape: f32[1,1], index: 11, kind: input, shape index: {}]
  %s12 = inlined_call_operand.vmem [shape: f32[2,1,128], index: 12, kind: output, shape index: {}]
  %s13 = sld [smem:[#allocation0]]
  $region81: #{discriminator_forward.1} parent=0
    _
  %s15 = ssub.s32 1, %s13
  %s16 = scalar_select 0, %s15, %s13
  %v17 = vstv %s11
  %18 = vst [vmem:[#allocation2] sm:$0x1] %v17
  loop: start=0, step=1, limit=4
  $region2: #{discriminator_forward.1} parent=0 // loop_pre_header
    _
  $region3: #{discriminator_forward.1} parent=0 // loop_header
    %s20 = sphi 0, %s24
    %p21 = scmp.ge.s32.totalorder %s20, 4
    %s30 = sphi 0, %s32
    %s33 = sphi 0, %s30
    %s34 = sphi 0, %s33
    %s50 = sphi 0, %s34
    %s54 = sphi 0, %s54
    %s56 = sphi 0, %s54
    %s57 = sphi 0, %s56
    %s71 = sphi 0, %s57
    %s75 = sphi 0, %s75
    %s77 = sphi 0, %s75
    %s78 = sphi 0, %s77
    %s92 = sphi 0, %s78
    %s96 = sphi 0, %s96
    %s98 = sphi 0, %s96
    %s99 = sphi 0, %s98
    %s113 = sphi 0, %s99
    %s117 = sphi 0, %s117
    %s119 = sphi 0, %s117
    %s120 = sphi 0, %s119
    %s134 = sphi 0, %s120
    %s138 = sphi 0, %s138
    %s140 = sphi 0, %s138
    %s141 = sphi 0, %s140
    %s155 = sphi 0, %s141
    %s159 = sphi 0, %s159
    %s161 = sphi 0, %s159
    %s162 = sphi 0, %s161
    %s176 = sphi 0, %s162
    %s180 = sphi 0, %s180
    %s182 = sphi 0, %s180
    %s183 = sphi 0, %s182
    %s197 = sphi 0, %s183
    %s201 = sphi 0, %s201
    %s203 = sphi 0, %s201
    %s204 = sphi 0, %s203
    %s218 = sphi 0, %s204
    %s222 = sphi 0, %s222
    %s224 = sphi 0, %s222
    %s225 = sphi 0, %s224
    %s239 = sphi 0, %s225
    %s243 = sphi 0, %s243
    %s245 = sphi 0, %s243
    %s246 = sphi 0, %s245
    %s260 = sphi 0, %s246
    %s264 = sphi 0, %s264
    %s266 = sphi 0, %s264
    %s267 = sphi 0, %s266
    %s281 = sphi 0, %s267
    %s287 = sphi 0, %s289
    %s290 = sphi 0, %s287
    %s291 = sphi 0, %s290
    %s307 = sphi 0, %s291
  $region4: #{discriminator_forward.1} parent=0 // loop_header_branch
    %23 = sbr.rel (%p21) target = $region8
  $region5: #{discriminator_forward.1} parent=0 // loop_body
    %s25 = ssub.s32 %s20, 1
    %s26 = ssub.s32 %s20, 2
    %s27 = sadd.s32 %s20, 1
    %s28 = ssub.s32 %s20, %s27
    %p29 = scmp.eq.s32.totalorder %s28, 0
    %s31 = sadd.s32 %s30, 1
    %s32 = scalar_select %p29, %s30, %s31
    %p35 = pneg %p29
    %p36 = scmp.eq.s32.totalorder %s20, 1
    %p37 = por %p35, %p36
    %p38 = scmp.ne.s32.totalorder %s30, %s33
    %p39 = scmp.eq.s32.totalorder %s20, 0
    %p40 = por %p38, %p39
    %p41 = scmp.ne.s32.totalorder %s30, %s33
    %p42 = scmp.eq.s32.totalorder %s25, 1
    %p43 = por %p41, %p42
    %p44 = scmp.ne.s32.totalorder %s33, %s34
    %p45 = scmp.eq.s32.totalorder %s25, 0
    %p46 = por %p44, %p45
    %p47 = scmp.ne.s32.totalorder %s33, %s34
    %p48 = scmp.eq.s32.totalorder %s26, 1
    %p49 = por %p47, %p48
    %p51 = scmp.ne.s32.totalorder %s34, %s50
    %p52 = scmp.eq.s32.totalorder %s26, 0
    %p53 = por %p51, %p52
    %s55 = sadd.s32 %s54, 1
    %p58 = scmp.eq.s32.totalorder %s20, 1
    %p59 = scmp.ne.s32.totalorder %s54, %s56
    %p60 = scmp.eq.s32.totalorder %s20, 0
    %p61 = por %p59, %p60
    %p62 = scmp.ne.s32.totalorder %s54, %s56
    %p63 = scmp.eq.s32.totalorder %s25, 1
    %p64 = por %p62, %p63
    %p65 = scmp.ne.s32.totalorder %s56, %s57
    %p66 = scmp.eq.s32.totalorder %s25, 0
    %p67 = por %p65, %p66
    %p68 = scmp.ne.s32.totalorder %s56, %s57
    %p69 = scmp.eq.s32.totalorder %s26, 1
    %p70 = por %p68, %p69
    %p72 = scmp.ne.s32.totalorder %s57, %s71
    %p73 = scmp.eq.s32.totalorder %s26, 0
    %p74 = por %p72, %p73
    %s76 = sadd.s32 %s75, 1
    %p79 = scmp.eq.s32.totalorder %s20, 1
    %p80 = scmp.ne.s32.totalorder %s75, %s77
    %p81 = scmp.eq.s32.totalorder %s20, 0
    %p82 = por %p80, %p81
    %p83 = scmp.ne.s32.totalorder %s75, %s77
    %p84 = scmp.eq.s32.totalorder %s25, 1
    %p85 = por %p83, %p84
    %p86 = scmp.ne.s32.totalorder %s77, %s78
    %p87 = scmp.eq.s32.totalorder %s25, 0
    %p88 = por %p86, %p87
    %p89 = scmp.ne.s32.totalorder %s77, %s78
    %p90 = scmp.eq.s32.totalorder %s26, 1
    %p91 = por %p89, %p90
    %p93 = scmp.ne.s32.totalorder %s78, %s92
    %p94 = scmp.eq.s32.totalorder %s26, 0
    %p95 = por %p93, %p94
    %s97 = sadd.s32 %s96, 1
    %p100 = scmp.eq.s32.totalorder %s20, 1
    %p101 = scmp.ne.s32.totalorder %s96, %s98
    %p102 = scmp.eq.s32.totalorder %s20, 0
    %p103 = por %p101, %p102
    %p104 = scmp.ne.s32.totalorder %s96, %s98
    %p105 = scmp.eq.s32.totalorder %s25, 1
    %p106 = por %p104, %p105
    %p107 = scmp.ne.s32.totalorder %s98, %s99
    %p108 = scmp.eq.s32.totalorder %s25, 0
    %p109 = por %p107, %p108
    %p110 = scmp.ne.s32.totalorder %s98, %s99
    %p111 = scmp.eq.s32.totalorder %s26, 1
    %p112 = por %p110, %p111
    %p114 = scmp.ne.s32.totalorder %s99, %s113
    %p115 = scmp.eq.s32.totalorder %s26, 0
    %p116 = por %p114, %p115
    %s118 = sadd.s32 %s117, 1
    %p121 = scmp.eq.s32.totalorder %s20, 1
    %p122 = scmp.ne.s32.totalorder %s117, %s119
    %p123 = scmp.eq.s32.totalorder %s20, 0
    %p124 = por %p122, %p123
    %p125 = scmp.ne.s32.totalorder %s117, %s119
    %p126 = scmp.eq.s32.totalorder %s25, 1
    %p127 = por %p125, %p126
    %p128 = scmp.ne.s32.totalorder %s119, %s120
    %p129 = scmp.eq.s32.totalorder %s25, 0
    %p130 = por %p128, %p129
    %p131 = scmp.ne.s32.totalorder %s119, %s120
    %p132 = scmp.eq.s32.totalorder %s26, 1
    %p133 = por %p131, %p132
    %p135 = scmp.ne.s32.totalorder %s120, %s134
    %p136 = scmp.eq.s32.totalorder %s26, 0
    %p137 = por %p135, %p136
    %s139 = sadd.s32 %s138, 1
    %p142 = scmp.eq.s32.totalorder %s20, 1
    %p143 = scmp.ne.s32.totalorder %s138, %s140
    %p144 = scmp.eq.s32.totalorder %s20, 0
    %p145 = por %p143, %p144
    %p146 = scmp.ne.s32.totalorder %s138, %s140
    %p147 = scmp.eq.s32.totalorder %s25, 1
    %p148 = por %p146, %p147
    %p149 = scmp.ne.s32.totalorder %s140, %s141
    %p150 = scmp.eq.s32.totalorder %s25, 0
    %p151 = por %p149, %p150
    %p152 = scmp.ne.s32.totalorder %s140, %s141
    %p153 = scmp.eq.s32.totalorder %s26, 1
    %p154 = por %p152, %p153
    %p156 = scmp.ne.s32.totalorder %s141, %s155
    %p157 = scmp.eq.s32.totalorder %s26, 0
    %p158 = por %p156, %p157
    %s160 = sadd.s32 %s159, 1
    %p163 = scmp.eq.s32.totalorder %s20, 1
    %p164 = scmp.ne.s32.totalorder %s159, %s161
    %p165 = scmp.eq.s32.totalorder %s20, 0
    %p166 = por %p164, %p165
    %p167 = scmp.ne.s32.totalorder %s159, %s161
    %p168 = scmp.eq.s32.totalorder %s25, 1
    %p169 = por %p167, %p168
    %p170 = scmp.ne.s32.totalorder %s161, %s162
    %p171 = scmp.eq.s32.totalorder %s25, 0
    %p172 = por %p170, %p171
    %p173 = scmp.ne.s32.totalorder %s161, %s162
    %p174 = scmp.eq.s32.totalorder %s26, 1
    %p175 = por %p173, %p174
    %p177 = scmp.ne.s32.totalorder %s162, %s176
    %p178 = scmp.eq.s32.totalorder %s26, 0
    %p179 = por %p177, %p178
    %s181 = sadd.s32 %s180, 1
    %p184 = scmp.eq.s32.totalorder %s20, 1
    %p185 = scmp.ne.s32.totalorder %s180, %s182
    %p186 = scmp.eq.s32.totalorder %s20, 0
    %p187 = por %p185, %p186
    %p188 = scmp.ne.s32.totalorder %s180, %s182
    %p189 = scmp.eq.s32.totalorder %s25, 1
    %p190 = por %p188, %p189
    %p191 = scmp.ne.s32.totalorder %s182, %s183
    %p192 = scmp.eq.s32.totalorder %s25, 0
    %p193 = por %p191, %p192
    %p194 = scmp.ne.s32.totalorder %s182, %s183
    %p195 = scmp.eq.s32.totalorder %s26, 1
    %p196 = por %p194, %p195
    %p198 = scmp.ne.s32.totalorder %s183, %s197
    %p199 = scmp.eq.s32.totalorder %s26, 0
    %p200 = por %p198, %p199
    %s202 = sadd.s32 %s201, 1
    %p205 = scmp.eq.s32.totalorder %s20, 1
    %p206 = scmp.ne.s32.totalorder %s201, %s203
    %p207 = scmp.eq.s32.totalorder %s20, 0
    %p208 = por %p206, %p207
    %p209 = scmp.ne.s32.totalorder %s201, %s203
    %p210 = scmp.eq.s32.totalorder %s25, 1
    %p211 = por %p209, %p210
    %p212 = scmp.ne.s32.totalorder %s203, %s204
    %p213 = scmp.eq.s32.totalorder %s25, 0
    %p214 = por %p212, %p213
    %p215 = scmp.ne.s32.totalorder %s203, %s204
    %p216 = scmp.eq.s32.totalorder %s26, 1
    %p217 = por %p215, %p216
    %p219 = scmp.ne.s32.totalorder %s204, %s218
    %p220 = scmp.eq.s32.totalorder %s26, 0
    %p221 = por %p219, %p220
    %s223 = sadd.s32 %s222, 1
    %p226 = scmp.eq.s32.totalorder %s20, 1
    %p227 = scmp.ne.s32.totalorder %s222, %s224
    %p228 = scmp.eq.s32.totalorder %s20, 0
    %p229 = por %p227, %p228
    %p230 = scmp.ne.s32.totalorder %s222, %s224
    %p231 = scmp.eq.s32.totalorder %s25, 1
    %p232 = por %p230, %p231
    %p233 = scmp.ne.s32.totalorder %s224, %s225
    %p234 = scmp.eq.s32.totalorder %s25, 0
    %p235 = por %p233, %p234
    %p236 = scmp.ne.s32.totalorder %s224, %s225
    %p237 = scmp.eq.s32.totalorder %s26, 1
    %p238 = por %p236, %p237
    %p240 = scmp.ne.s32.totalorder %s225, %s239
    %p241 = scmp.eq.s32.totalorder %s26, 0
    %p242 = por %p240, %p241
    %s244 = sadd.s32 %s243, 1
    %p247 = scmp.eq.s32.totalorder %s20, 1
    %p248 = scmp.ne.s32.totalorder %s243, %s245
    %p249 = scmp.eq.s32.totalorder %s20, 0
    %p250 = por %p248, %p249
    %p251 = scmp.ne.s32.totalorder %s243, %s245
    %p252 = scmp.eq.s32.totalorder %s25, 1
    %p253 = por %p251, %p252
    %p254 = scmp.ne.s32.totalorder %s245, %s246
    %p255 = scmp.eq.s32.totalorder %s25, 0
    %p256 = por %p254, %p255
    %p257 = scmp.ne.s32.totalorder %s245, %s246
    %p258 = scmp.eq.s32.totalorder %s26, 1
    %p259 = por %p257, %p258
    %p261 = scmp.ne.s32.totalorder %s246, %s260
    %p262 = scmp.eq.s32.totalorder %s26, 0
    %p263 = por %p261, %p262
    %s265 = sadd.s32 %s264, 1
    %p268 = scmp.eq.s32.totalorder %s20, 1
    %p269 = scmp.ne.s32.totalorder %s264, %s266
    %p270 = scmp.eq.s32.totalorder %s20, 0
    %p271 = por %p269, %p270
    %p272 = scmp.ne.s32.totalorder %s264, %s266
    %p273 = scmp.eq.s32.totalorder %s25, 1
    %p274 = por %p272, %p273
    %p275 = scmp.ne.s32.totalorder %s266, %s267
    %p276 = scmp.eq.s32.totalorder %s25, 0
    %p277 = por %p275, %p276
    %p278 = scmp.ne.s32.totalorder %s266, %s267
    %p279 = scmp.eq.s32.totalorder %s26, 1
    %p280 = por %p278, %p279
    %p282 = scmp.ne.s32.totalorder %s267, %s281
    %p283 = scmp.eq.s32.totalorder %s26, 0
    %p284 = por %p282, %p283
    %s285 = ssub.s32 %s20, %s27
    %p286 = scmp.eq.s32.totalorder %s285, 0
    %s288 = sadd.s32 %s287, 1
    %s289 = scalar_select %p286, %s287, %s288
    %p292 = pneg %p286
    %p293 = scmp.eq.s32.totalorder %s20, 1
    %p294 = por %p292, %p293
    %p295 = scmp.ne.s32.totalorder %s287, %s290
    %p296 = scmp.eq.s32.totalorder %s20, 0
    %p297 = por %p295, %p296
    %p298 = scmp.ne.s32.totalorder %s287, %s290
    %p299 = scmp.eq.s32.totalorder %s25, 1
    %p300 = por %p298, %p299
    %p301 = scmp.ne.s32.totalorder %s290, %s291
    %p302 = scmp.eq.s32.totalorder %s25, 0
    %p303 = por %p301, %p302
    %p304 = scmp.ne.s32.totalorder %s290, %s291
    %p305 = scmp.eq.s32.totalorder %s26, 1
    %p306 = por %p304, %p305
    %p308 = scmp.ne.s32.totalorder %s291, %s307
    %p309 = scmp.eq.s32.totalorder %s26, 0
    %p310 = por %p308, %p309
    %p311 = scmp.le.s32.totalorder 1, %s20
    %p312 = scmp.lt.s32.totalorder %s20, 3
    %p313 = pnand %p311, %p312
    %p314 = pneg %p313
    // Predicated region
    $region9: #{discriminator_forward.1} parent=5 // pred_check
      _
    $region10: #{discriminator_forward.1} parent=5 // pred_check_branch
      %316 = sbr.rel (%p313) target = $region12
    $region11: #{discriminator_forward.1} parent=5 // pred_region
      %s317 = ssub.s32 %s20, 1
      // Predicated region
      $region13: #{discriminator_forward.1} parent=11 // pred_check
        %p318 = pneg %p67
      $region14: #{discriminator_forward.1} parent=11 // pred_check_branch
        %320 = sbr.rel (%p318) target = $region16
      $region15: #{discriminator_forward.1} parent=11 // pred_region
        _
      $region16: #{discriminator_forward.1} parent=11 // pred_fallthru
        _
      // Predicated region
      $region17: #{discriminator_forward.1} parent=11 // pred_check
        %p321 = pneg %p88
      $region18: #{discriminator_forward.1} parent=11 // pred_check_branch
        %323 = sbr.rel (%p321) target = $region20
      $region19: #{discriminator_forward.1} parent=11 // pred_region
        _
      $region20: #{discriminator_forward.1} parent=11 // pred_fallthru
        _
      // Predicated region
      $region21: #{discriminator_forward.1} parent=11 // pred_check
        %p324 = pneg %p109
      $region22: #{discriminator_forward.1} parent=11 // pred_check_branch
        %326 = sbr.rel (%p324) target = $region24
      $region23: #{discriminator_forward.1} parent=11 // pred_region
        _
      $region24: #{discriminator_forward.1} parent=11 // pred_fallthru
        _
      // Predicated region
      $region25: #{discriminator_forward.1} parent=11 // pred_check
        %p327 = pneg %p130
      $region26: #{discriminator_forward.1} parent=11 // pred_check_branch
        %329 = sbr.rel (%p327) target = $region28
      $region27: #{discriminator_forward.1} parent=11 // pred_region
        _
      $region28: #{discriminator_forward.1} parent=11 // pred_fallthru
        _
      // Predicated region
      $region29: #{discriminator_forward.1} parent=11 // pred_check
        %p330 = pneg %p151
      $region30: #{discriminator_forward.1} parent=11 // pred_check_branch
        %332 = sbr.rel (%p330) target = $region32
      $region31: #{discriminator_forward.1} parent=11 // pred_region
        _
      $region32: #{discriminator_forward.1} parent=11 // pred_fallthru
        _
      // Predicated region
      $region33: #{discriminator_forward.1} parent=11 // pred_check
        %p333 = pneg %p172
      $region34: #{discriminator_forward.1} parent=11 // pred_check_branch
        %335 = sbr.rel (%p333) target = $region36
      $region35: #{discriminator_forward.1} parent=11 // pred_region
        _
      $region36: #{discriminator_forward.1} parent=11 // pred_fallthru
        _
      // Predicated region
      $region37: #{discriminator_forward.1} parent=11 // pred_check
        %p336 = pneg %p193
      $region38: #{discriminator_forward.1} parent=11 // pred_check_branch
        %338 = sbr.rel (%p336) target = $region40
      $region39: #{discriminator_forward.1} parent=11 // pred_region
        _
      $region40: #{discriminator_forward.1} parent=11 // pred_fallthru
        _
      // Predicated region
      $region41: #{discriminator_forward.1} parent=11 // pred_check
        %p339 = pneg %p214
      $region42: #{discriminator_forward.1} parent=11 // pred_check_branch
        %341 = sbr.rel (%p339) target = $region44
      $region43: #{discriminator_forward.1} parent=11 // pred_region
        _
      $region44: #{discriminator_forward.1} parent=11 // pred_fallthru
        _
      // Predicated region
      $region45: #{discriminator_forward.1} parent=11 // pred_check
        %p342 = pneg %p235
      $region46: #{discriminator_forward.1} parent=11 // pred_check_branch
        %344 = sbr.rel (%p342) target = $region48
      $region47: #{discriminator_forward.1} parent=11 // pred_region
        _
      $region48: #{discriminator_forward.1} parent=11 // pred_fallthru
        _
      // Predicated region
      $region49: #{discriminator_forward.1} parent=11 // pred_check
        %p345 = pneg %p256
      $region50: #{discriminator_forward.1} parent=11 // pred_check_branch
        %347 = sbr.rel (%p345) target = $region52
      $region51: #{discriminator_forward.1} parent=11 // pred_region
        _
      $region52: #{discriminator_forward.1} parent=11 // pred_fallthru
        _
      // Predicated region
      $region53: #{discriminator_forward.1} parent=11 // pred_check
        %p348 = pneg %p277
      $region54: #{discriminator_forward.1} parent=11 // pred_check_branch
        %350 = sbr.rel (%p348) target = $region56
      $region55: #{discriminator_forward.1} parent=11 // pred_region
        _
      $region56: #{discriminator_forward.1} parent=11 // pred_fallthru
        _
    $region12: #{discriminator_forward.1} parent=5 // pred_fallthru
      _
    %p351 = scmp.lt.s32.totalorder %s20, 2
    // Predicated region
    $region57: #{discriminator_forward.1} parent=5 // pred_check
      %p352 = pneg %p351
    $region58: #{discriminator_forward.1} parent=5 // pred_check_branch
      %354 = sbr.rel (%p352) target = $region60
    $region59: #{discriminator_forward.1} parent=5 // pred_region
      // Predicated region
      $region61: #{discriminator_forward.1} parent=59 // pred_check
        %p355 = pneg %p40
      $region62: #{discriminator_forward.1} parent=59 // pred_check_branch
        %357 = sbr.rel (%p355) target = $region64
      $region63: #{discriminator_forward.1} parent=59 // pred_region
        %p358 = scmp.lt.s32.totalorder %s20, 1
        %s359 = scalar_select %p358, %s20, 1
        %s360 = smul.addr %s359, 2
        %s361 = smul.addr %s360, 2
        %s362 = scalar_lea.vmem %s0, %s361
      $region64: #{discriminator_forward.1} parent=59 // pred_fallthru
        _
    $region60: #{discriminator_forward.1} parent=5 // pred_fallthru
      _
    %p363 = scmp.le.s32.totalorder 1, %s20
    %p364 = scmp.lt.s32.totalorder %s20, 3
    %p365 = pnand %p363, %p364
    %p366 = pneg %p365
    // Predicated region
    $region65: #{discriminator_forward.1} parent=5 // pred_check
      _
    $region66: #{discriminator_forward.1} parent=5 // pred_check_branch
      %368 = sbr.rel (%p365) target = $region68
    $region67: #{discriminator_forward.1} parent=5 // pred_region
      %s369 = ssub.s32 %s20, 1
      %p370 = scmp.lt.s32.totalorder %s25, 1
      %s371 = scalar_select %p370, %s25, 1
      %s372 = smul.addr %s371, 2
      %s373 = smul.addr %s372, 2
      %s374 = scalar_lea.vmem %s0, %s373
      %p375 = pneg %p46
      %p376 = pneg %p43
      %p377 = pneg %p67
      %p378 = pneg %p64
      %p379 = pneg %p88
      %p380 = pneg %p85
      %p381 = pneg %p109
      %p382 = pneg %p106
      %p383 = pneg %p130
      %p384 = pneg %p127
      %p385 = pneg %p151
      %p386 = pneg %p148
      %p387 = pneg %p172
      %p388 = pneg %p169
      %p389 = pneg %p193
      %p390 = pneg %p190
      %p391 = pneg %p214
      %p392 = pneg %p211
      %p393 = pneg %p235
      %p394 = pneg %p232
      %p395 = pneg %p256
      %p396 = pneg %p253
      %p397 = pneg %p277
      %p398 = pneg %p274
      %p399 = pneg %p303
      %p400 = pneg %p300
      %p401 = scmp.lt.s32.totalorder %s25, 1
      %s402 = scalar_select %p401, %s25, 1
      %s403 = scalar_lea.vmem %s12, %s402
      %p404 = scmp.lt.s32.totalorder %s25, 1
      %s405 = scalar_select %p404, %s25, 1
      %s406 = smul.addr %s405, 2
      %s407 = smul.addr %s406, 2
      %s408 = scalar_lea.vmem %s0, %s407
      %p409 = scmp.lt.s32.totalorder %s25, 1
      %s410 = scalar_select %p409, %s25, 1
      %s411 = scalar_lea.vmem %s12, %s410
      %v413 = vld [vmem:[%s408] sm:$0xf]
      %v414 = vld [vmem:[%s1] sm:$0xff]
      %v415 = vld [vmem:[%s1 + $0x8] sm:$0xff]
      %v416 = vld [vmem:[%s1 + $0x10] sm:$0xff]
      %v417 = vld [vmem:[%s1 + $0x18] sm:$0xff]
      %v418 = vld [vmem:[%s1 + $0x20] sm:$0xff]
      %v419 = vld [vmem:[%s1 + $0x28] sm:$0xff]
      %v420 = vld [vmem:[%s1 + $0x30] sm:$0xf]
      %v421 = vld [vmem:[%s1 + $0x34] sm:$0xff]
      %v422 = vld [vmem:[%s1 + $0x3c] sm:$0xff]
      %v423 = vld [vmem:[%s1 + $0x44] sm:$0xff]
      %v424 = vld [vmem:[%s1 + $0x4c] sm:$0xff]
      %v425 = vld [vmem:[%s1 + $0x54] sm:$0xff]
      %v426 = vld [vmem:[%s1 + $0x5c] sm:$0xff]
      %v427 = vld [vmem:[%s1 + $0x64] sm:$0xf]
      %v428 = vld [vmem:[%s1 + $0x68] sm:$0xff]
      %v429 = vld [vmem:[%s1 + $0x70] sm:$0xff]
      %v430 = vld [vmem:[%s1 + $0x78] sm:$0xff]
      %v431 = vld [vmem:[%s1 + $0x80] sm:$0xff]
      %v432 = vld [vmem:[%s1 + $0x88] sm:$0xff]
      %v433 = vld [vmem:[%s1 + $0x90] sm:$0xff]
      %v434 = vld [vmem:[%s1 + $0x98] sm:$0xf]
      %v435 = vld [vmem:[%s1 + $0x9c] sm:$0xff]
      %v436 = vld [vmem:[%s1 + $0xa4] sm:$0xff]
      %v437 = vld [vmem:[%s1 + $0xac] sm:$0xff]
      %v438 = vld [vmem:[%s1 + $0xb4] sm:$0xff]
      %v439 = vld [vmem:[%s1 + $0xbc] sm:$0xff]
      %v440 = vld [vmem:[%s1 + $0xc4] sm:$0xff]
      %v441 = vld [vmem:[%s1 + $0xcc] sm:$0xf]
      %v442 = vld [vmem:[%s1 + $0xd0] sm:$0xff]
      %v443 = vld [vmem:[%s1 + $0xd8] sm:$0xff]
      %v444 = vld [vmem:[%s1 + $0xe0] sm:$0xff]
      %v445 = vld [vmem:[%s1 + $0xe8] sm:$0xff]
      %v446 = vld [vmem:[%s1 + $0xf0] sm:$0xff]
      %v447 = vld [vmem:[%s1 + $0xf8] sm:$0xff]
      %v448 = vld [vmem:[%s1 + $0x100] sm:$0xf]
      %v449 = vld [vmem:[%s1 + $0x104] sm:$0xff]
      %v450 = vld [vmem:[%s1 + $0x10c] sm:$0xff]
      %v451 = vld [vmem:[%s1 + $0x114] sm:$0xff]
      %v452 = vld [vmem:[%s1 + $0x11c] sm:$0xff]
      %v453 = vld [vmem:[%s1 + $0x124] sm:$0xff]
      %v454 = vld [vmem:[%s1 + $0x12c] sm:$0xff]
      %v455 = vld [vmem:[%s1 + $0x134] sm:$0xf]
      %v456 = vld [vmem:[%s1 + $0x138] sm:$0xff]
      %v457 = vld [vmem:[%s1 + $0x140] sm:$0xff]
      %v458 = vld [vmem:[%s1 + $0x148] sm:$0xff]
      %v459 = vld [vmem:[%s1 + $0x150] sm:$0xff]
      %v460 = vld [vmem:[%s1 + $0x158] sm:$0xff]
      %v461 = vld [vmem:[%s1 + $0x160] sm:$0xff]
      %v462 = vld [vmem:[%s1 + $0x168] sm:$0xf]
      %v463 = vld [vmem:[%s1 + $0x16c] sm:$0xff]
      %v464 = vld [vmem:[%s1 + $0x174] sm:$0xff]
      %v465 = vld [vmem:[%s1 + $0x17c] sm:$0xff]
      %v466 = vld [vmem:[%s1 + $0x184] sm:$0xff]
      %v467 = vld [vmem:[%s1 + $0x18c] sm:$0xff]
      %v468 = vld [vmem:[%s1 + $0x194] sm:$0xff]
      %v469 = vld [vmem:[%s1 + $0x19c] sm:$0xf]
      %v470 = vld [vmem:[%s1 + $0x1a0] sm:$0xff]
      %v471 = vld [vmem:[%s1 + $0x1a8] sm:$0xff]
      %v472 = vld [vmem:[%s1 + $0x1b0] sm:$0xff]
      %v473 = vld [vmem:[%s1 + $0x1b8] sm:$0xff]
      %v474 = vld [vmem:[%s1 + $0x1c0] sm:$0xff]
      %v475 = vld [vmem:[%s1 + $0x1c8] sm:$0xff]
      %v476 = vld [vmem:[%s1 + $0x1d0] sm:$0xf]
      %v477 = vld [vmem:[%s1 + $0x1d4] sm:$0xff]
      %v478 = vld [vmem:[%s1 + $0x1dc] sm:$0xff]
      %v479 = vld [vmem:[%s1 + $0x1e4] sm:$0xff]
      %v480 = vld [vmem:[%s1 + $0x1ec] sm:$0xff]
      %v481 = vld [vmem:[%s1 + $0x1f4] sm:$0xff]
      %v482 = vld [vmem:[%s1 + $0x1fc] sm:$0xff]
      %v483 = vld [vmem:[%s1 + $0x204] sm:$0xf]
      %v484 = vld [vmem:[%s1 + $0x208] sm:$0xff]
      %v485 = vld [vmem:[%s1 + $0x210] sm:$0xff]
      %v486 = vld [vmem:[%s1 + $0x218] sm:$0xff]
      %v487 = vld [vmem:[%s1 + $0x220] sm:$0xff]
      %v488 = vld [vmem:[%s1 + $0x228] sm:$0xff]
      %v489 = vld [vmem:[%s1 + $0x230] sm:$0xff]
      %v490 = vld [vmem:[%s1 + $0x238] sm:$0xf]
      %v491 = vld [vmem:[%s1 + $0x23c] sm:$0xff]
      %v492 = vld [vmem:[%s1 + $0x244] sm:$0xff]
      %v493 = vld [vmem:[%s1 + $0x24c] sm:$0xff]
      %v494 = vld [vmem:[%s1 + $0x254] sm:$0xff]
      %v495 = vld [vmem:[%s1 + $0x25c] sm:$0xff]
      %v496 = vld [vmem:[%s1 + $0x264] sm:$0xff]
      %v497 = vld [vmem:[%s1 + $0x26c] sm:$0xf]
      %v498 = vld [vmem:[%s1 + $0x270] sm:$0xff]
      %v499 = vld [vmem:[%s1 + $0x278] sm:$0xff]
      %v500 = vld [vmem:[%s1 + $0x280] sm:$0xff]
      %v501 = vld [vmem:[%s1 + $0x288] sm:$0xff]
      %v502 = vld [vmem:[%s1 + $0x290] sm:$0xff]
      %v503 = vld [vmem:[%s1 + $0x298] sm:$0xff]
      %v504 = vld [vmem:[%s1 + $0x2a0] sm:$0xf]
      %v505 = vld [vmem:[%s1 + $0x2a4] sm:$0xff]
      %v506 = vld [vmem:[%s1 + $0x2ac] sm:$0xff]
      %v507 = vld [vmem:[%s1 + $0x2b4] sm:$0xff]
      %v508 = vld [vmem:[%s1 + $0x2bc] sm:$0xff]
      %v509 = vld [vmem:[%s1 + $0x2c4] sm:$0xff]
      %v510 = vld [vmem:[%s1 + $0x2cc] sm:$0xff]
      %v511 = vld [vmem:[%s1 + $0x2d4] sm:$0xf]
      %v512 = vld [vmem:[%s1 + $0x2d8] sm:$0xff]
      %v513 = vld [vmem:[%s1 + $0x2e0] sm:$0xff]
      %v514 = vld [vmem:[%s1 + $0x2e8] sm:$0xff]
      %v515 = vld [vmem:[%s1 + $0x2f0] sm:$0xff]
      %v516 = vld [vmem:[%s1 + $0x2f8] sm:$0xff]
      %v517 = vld [vmem:[%s1 + $0x300] sm:$0xff]
      %v518 = vld [vmem:[%s1 + $0x308] sm:$0xf]
      %v519 = vld [vmem:[%s1 + $0x30c] sm:$0xff]
      %v520 = vld [vmem:[%s1 + $0x314] sm:$0xff]
      %v521 = vld [vmem:[%s1 + $0x31c] sm:$0xff]
      %v522 = vld [vmem:[%s1 + $0x324] sm:$0xff]
      %v523 = vld [vmem:[%s1 + $0x32c] sm:$0xff]
      %v524 = vld [vmem:[%s1 + $0x334] sm:$0xff]
      %v525 = vld [vmem:[%s1 + $0x33c] sm:$0xf]
      %v526 = vld [vmem:[%s1 + $0x340] sm:$0xff]
      %v527 = vld [vmem:[%s1 + $0x348] sm:$0xff]
      %v528 = vld [vmem:[%s1 + $0x350] sm:$0xff]
      %v529 = vld [vmem:[%s1 + $0x358] sm:$0xff]
      %v530 = vld [vmem:[%s1 + $0x360] sm:$0xff]
      %v531 = vld [vmem:[%s1 + $0x368] sm:$0xff]
      %v532 = vld [vmem:[%s1 + $0x370] sm:$0xf]
      %v533 = vld [vmem:[%s1 + $0x374] sm:$0xff]
      %v534 = vld [vmem:[%s1 + $0x37c] sm:$0xff]
      %v535 = vld [vmem:[%s1 + $0x384] sm:$0xff]
      %v536 = vld [vmem:[%s1 + $0x38c] sm:$0xff]
      %v537 = vld [vmem:[%s1 + $0x394] sm:$0xff]
      %v538 = vld [vmem:[%s1 + $0x39c] sm:$0xff]
      %v539 = vld [vmem:[%s1 + $0x3a4] sm:$0xf]
      %v540 = vld [vmem:[%s1 + $0x3a8] sm:$0xff]
      %v541 = vld [vmem:[%s1 + $0x3b0] sm:$0xff]
      %v542 = vld [vmem:[%s1 + $0x3b8] sm:$0xff]
      %v543 = vld [vmem:[%s1 + $0x3c0] sm:$0xff]
      %v544 = vld [vmem:[%s1 + $0x3c8] sm:$0xff]
      %v545 = vld [vmem:[%s1 + $0x3d0] sm:$0xff]
      %v546 = vld [vmem:[%s1 + $0x3d8] sm:$0xf]
      %v547 = vld [vmem:[%s1 + $0x3dc] sm:$0xff]
      %v548 = vld [vmem:[%s1 + $0x3e4] sm:$0xff]
      %v549 = vld [vmem:[%s1 + $0x3ec] sm:$0xff]
      %v550 = vld [vmem:[%s1 + $0x3f4] sm:$0xff]
      %v551 = vld [vmem:[%s1 + $0x3fc] sm:$0xff]
      %v552 = vld [vmem:[%s1 + $0x404] sm:$0xff]
      %v553 = vld [vmem:[%s1 + $0x40c] sm:$0xf]
      %v554 = vld [vmem:[%s1 + $0x410] sm:$0xff]
      %v555 = vld [vmem:[%s1 + $0x418] sm:$0xff]
      %v556 = vld [vmem:[%s1 + $0x420] sm:$0xff]
      %v557 = vld [vmem:[%s1 + $0x428] sm:$0xff]
      %v558 = vld [vmem:[%s1 + $0x430] sm:$0xff]
      %v559 = vld [vmem:[%s1 + $0x438] sm:$0xff]
      %v560 = vld [vmem:[%s1 + $0x440] sm:$0xf]
      %v561 = vld [vmem:[%s1 + $0x444] sm:$0xff]
      %v562 = vld [vmem:[%s1 + $0x44c] sm:$0xff]
      %v563 = vld [vmem:[%s1 + $0x454] sm:$0xff]
      %v564 = vld [vmem:[%s1 + $0x45c] sm:$0xff]
      %v565 = vld [vmem:[%s1 + $0x464] sm:$0xff]
      %v566 = vld [vmem:[%s1 + $0x46c] sm:$0xff]
      %v567 = vld [vmem:[%s1 + $0x474] sm:$0xf]
      %v568 = vld [vmem:[%s1 + $0x478] sm:$0xff]
      %v569 = vld [vmem:[%s1 + $0x480] sm:$0xff]
      %v570 = vld [vmem:[%s1 + $0x488] sm:$0xff]
      %v571 = vld [vmem:[%s1 + $0x490] sm:$0xff]
      %v572 = vld [vmem:[%s1 + $0x498] sm:$0xff]
      %v573 = vld [vmem:[%s1 + $0x4a0] sm:$0xff]
      %v574 = vld [vmem:[%s1 + $0x4a8] sm:$0xf]
      %v575 = vld [vmem:[%s1 + $0x4ac] sm:$0xff]
      %v576 = vld [vmem:[%s1 + $0x4b4] sm:$0xff]
      %v577 = vld [vmem:[%s1 + $0x4bc] sm:$0xff]
      %v578 = vld [vmem:[%s1 + $0x4c4] sm:$0xff]
      %v579 = vld [vmem:[%s1 + $0x4cc] sm:$0xff]
      %v580 = vld [vmem:[%s1 + $0x4d4] sm:$0xff]
      %v581 = vld [vmem:[%s1 + $0x4dc] sm:$0xf]
      %v582 = vld [vmem:[%s1 + $0x4e0] sm:$0xff]
      %v583 = vld [vmem:[%s1 + $0x4e8] sm:$0xff]
      %v584 = vld [vmem:[%s1 + $0x4f0] sm:$0xff]
      %v585 = vld [vmem:[%s1 + $0x4f8] sm:$0xff]
      %v586 = vld [vmem:[%s1 + $0x500] sm:$0xff]
      %v587 = vld [vmem:[%s1 + $0x508] sm:$0xff]
      %v588 = vld [vmem:[%s1 + $0x510] sm:$0xf]
      %v589 = vld [vmem:[%s1 + $0x514] sm:$0xff]
      %v590 = vld [vmem:[%s1 + $0x51c] sm:$0xff]
      %v591 = vld [vmem:[%s1 + $0x524] sm:$0xff]
      %v592 = vld [vmem:[%s1 + $0x52c] sm:$0xff]
      %v593 = vld [vmem:[%s1 + $0x534] sm:$0xff]
      %v594 = vld [vmem:[%s1 + $0x53c] sm:$0xff]
      %v595 = vld [vmem:[%s1 + $0x544] sm:$0xf]
      %v596 = vld [vmem:[%s1 + $0x548] sm:$0xff]
      %v597 = vld [vmem:[%s1 + $0x550] sm:$0xff]
      %v598 = vld [vmem:[%s1 + $0x558] sm:$0xff]
      %v599 = vld [vmem:[%s1 + $0x560] sm:$0xff]
      %v600 = vld [vmem:[%s1 + $0x568] sm:$0xff]
      %v601 = vld [vmem:[%s1 + $0x570] sm:$0xff]
      %v602 = vld [vmem:[%s1 + $0x578] sm:$0xf]
      %v603 = vld [vmem:[%s1 + $0x57c] sm:$0xff]
      %v604 = vld [vmem:[%s1 + $0x584] sm:$0xff]
      %v605 = vld [vmem:[%s1 + $0x58c] sm:$0xff]
      %v606 = vld [vmem:[%s1 + $0x594] sm:$0xff]
      %v607 = vld [vmem:[%s1 + $0x59c] sm:$0xff]
      %v608 = vld [vmem:[%s1 + $0x5a4] sm:$0xff]
      %v609 = vld [vmem:[%s1 + $0x5ac] sm:$0xf]
      %v610 = vld [vmem:[%s1 + $0x5b0] sm:$0xff]
      %v611 = vld [vmem:[%s1 + $0x5b8] sm:$0xff]
      %v612 = vld [vmem:[%s1 + $0x5c0] sm:$0xff]
      %v613 = vld [vmem:[%s1 + $0x5c8] sm:$0xff]
      %v614 = vld [vmem:[%s1 + $0x5d0] sm:$0xff]
      %v615 = vld [vmem:[%s1 + $0x5d8] sm:$0xff]
      %v616 = vld [vmem:[%s1 + $0x5e0] sm:$0xf]
      %v617 = vld [vmem:[%s1 + $0x5e4] sm:$0xff]
      %v618 = vld [vmem:[%s1 + $0x5ec] sm:$0xff]
      %v619 = vld [vmem:[%s1 + $0x5f4] sm:$0xff]
      %v620 = vld [vmem:[%s1 + $0x5fc] sm:$0xff]
      %v621 = vld [vmem:[%s1 + $0x604] sm:$0xff]
      %v622 = vld [vmem:[%s1 + $0x60c] sm:$0xff]
      %v623 = vld [vmem:[%s1 + $0x614] sm:$0xf]
      %v624 = vld [vmem:[%s1 + $0x618] sm:$0xff]
      %v625 = vld [vmem:[%s1 + $0x620] sm:$0xff]
      %v626 = vld [vmem:[%s1 + $0x628] sm:$0xff]
      %v627 = vld [vmem:[%s1 + $0x630] sm:$0xff]
      %v628 = vld [vmem:[%s1 + $0x638] sm:$0xff]
      %v629 = vld [vmem:[%s1 + $0x640] sm:$0xff]
      %v630 = vld [vmem:[%s1 + $0x648] sm:$0xf]
      %v631 = vld [vmem:[%s1 + $0x64c] sm:$0xff]
      %v632 = vld [vmem:[%s1 + $0x654] sm:$0xff]
      %v633 = vld [vmem:[%s1 + $0x65c] sm:$0xff]
      %v634 = vld [vmem:[%s1 + $0x664] sm:$0xff]
      %v635 = vld [vmem:[%s1 + $0x66c] sm:$0xff]
      %v636 = vld [vmem:[%s1 + $0x674] sm:$0xff]
      %v637 = vld [vmem:[%s1 + $0x67c] sm:$0xf]
      %639 = vst [vmem:[#allocation1] ss:$4 sm:$0xff] %v413
      %v640 = vld.sshfl [vmem:[#allocation1] sm:$0xff pattern:$0x73625140]
      %v641 = vld.sshfl [vmem:[#allocation1 + $0x8] sm:$0xff pattern:$0x73625140]
      %v868 = vunpack.c.l.b16 %v414
      %v869 = vunpack.c.h.b16 %v414
      %v870 = vunpack.c.l.b16 %v415
      %v871 = vunpack.c.h.b16 %v415
      %v872 = vunpack.c.l.b16 %v416
      %v873 = vunpack.c.h.b16 %v416
      %v874 = vunpack.c.l.b16 %v417
      %v875 = vunpack.c.h.b16 %v417
      %v876 = vunpack.c.l.b16 %v418
      %v877 = vunpack.c.h.b16 %v418
      %v878 = vunpack.c.l.b16 %v419
      %v879 = vunpack.c.h.b16 %v419
      %v880 = vunpack.c.l.b16 %v420
      %v881 = vunpack.c.l.b16 %v421
      %v882 = vunpack.c.h.b16 %v421
      %v883 = vunpack.c.l.b16 %v422
      %v884 = vunpack.c.h.b16 %v422
      %v885 = vunpack.c.l.b16 %v423
      %v886 = vunpack.c.h.b16 %v423
      %v887 = vunpack.c.l.b16 %v424
      %v888 = vunpack.c.h.b16 %v424
      %v889 = vunpack.c.l.b16 %v425
      %v890 = vunpack.c.h.b16 %v425
      %v891 = vunpack.c.l.b16 %v426
      %v892 = vunpack.c.h.b16 %v426
      %v893 = vunpack.c.l.b16 %v427
      %v894 = vunpack.c.l.b16 %v428
      %v895 = vunpack.c.h.b16 %v428
      %v896 = vunpack.c.l.b16 %v429
      %v897 = vunpack.c.h.b16 %v429
      %v898 = vunpack.c.l.b16 %v430
      %v899 = vunpack.c.h.b16 %v430
      %v900 = vunpack.c.l.b16 %v431
      %v901 = vunpack.c.h.b16 %v431
      %v902 = vunpack.c.l.b16 %v432
      %v903 = vunpack.c.h.b16 %v432
      %v904 = vunpack.c.l.b16 %v433
      %v905 = vunpack.c.h.b16 %v433
      %v906 = vunpack.c.l.b16 %v434
      %v907 = vunpack.c.l.b16 %v435
      %v908 = vunpack.c.h.b16 %v435
      %v909 = vunpack.c.l.b16 %v436
      %v910 = vunpack.c.h.b16 %v436
      %v911 = vunpack.c.l.b16 %v437
      %v912 = vunpack.c.h.b16 %v437
      %v913 = vunpack.c.l.b16 %v438
      %v914 = vunpack.c.h.b16 %v438
      %v915 = vunpack.c.l.b16 %v439
      %v916 = vunpack.c.h.b16 %v439
      %v917 = vunpack.c.l.b16 %v440
      %v918 = vunpack.c.h.b16 %v440
      %v919 = vunpack.c.l.b16 %v441
      %v920 = vunpack.c.l.b16 %v442
      %v921 = vunpack.c.h.b16 %v442
      %v922 = vunpack.c.l.b16 %v443
      %v923 = vunpack.c.h.b16 %v443
      %v924 = vunpack.c.l.b16 %v444
      %v925 = vunpack.c.h.b16 %v444
      %v926 = vunpack.c.l.b16 %v445
      %v927 = vunpack.c.h.b16 %v445
      %v928 = vunpack.c.l.b16 %v446
      %v929 = vunpack.c.h.b16 %v446
      %v930 = vunpack.c.l.b16 %v447
      %v931 = vunpack.c.h.b16 %v447
      %v932 = vunpack.c.l.b16 %v448
      %v933 = vunpack.c.l.b16 %v449
      %v934 = vunpack.c.h.b16 %v449
      %v935 = vunpack.c.l.b16 %v450
      %v936 = vunpack.c.h.b16 %v450
      %v937 = vunpack.c.l.b16 %v451
      %v938 = vunpack.c.h.b16 %v451
      %v939 = vunpack.c.l.b16 %v452
      %v940 = vunpack.c.h.b16 %v452
      %v941 = vunpack.c.l.b16 %v453
      %v942 = vunpack.c.h.b16 %v453
      %v943 = vunpack.c.l.b16 %v454
      %v944 = vunpack.c.h.b16 %v454
      %v945 = vunpack.c.l.b16 %v455
      %v946 = vunpack.c.l.b16 %v456
      %v947 = vunpack.c.h.b16 %v456
      %v948 = vunpack.c.l.b16 %v457
      %v949 = vunpack.c.h.b16 %v457
      %v950 = vunpack.c.l.b16 %v458
      %v951 = vunpack.c.h.b16 %v458
      %v952 = vunpack.c.l.b16 %v459
      %v953 = vunpack.c.h.b16 %v459
      %v954 = vunpack.c.l.b16 %v460
      %v955 = vunpack.c.h.b16 %v460
      %v956 = vunpack.c.l.b16 %v461
      %v957 = vunpack.c.h.b16 %v461
      %v958 = vunpack.c.l.b16 %v462
      %v959 = vunpack.c.l.b16 %v463
      %v960 = vunpack.c.h.b16 %v463
      %v961 = vunpack.c.l.b16 %v464
      %v962 = vunpack.c.h.b16 %v464
      %v963 = vunpack.c.l.b16 %v465
      %v964 = vunpack.c.h.b16 %v465
      %v965 = vunpack.c.l.b16 %v466
      %v966 = vunpack.c.h.b16 %v466
      %v967 = vunpack.c.l.b16 %v467
      %v968 = vunpack.c.h.b16 %v467
      %v969 = vunpack.c.l.b16 %v468
      %v970 = vunpack.c.h.b16 %v468
      %v971 = vunpack.c.l.b16 %v469
      %v972 = vunpack.c.l.b16 %v470
      %v973 = vunpack.c.h.b16 %v470
      %v974 = vunpack.c.l.b16 %v471
      %v975 = vunpack.c.h.b16 %v471
      %v976 = vunpack.c.l.b16 %v472
      %v977 = vunpack.c.h.b16 %v472
      %v978 = vunpack.c.l.b16 %v473
      %v979 = vunpack.c.h.b16 %v473
      %v980 = vunpack.c.l.b16 %v474
      %v981 = vunpack.c.h.b16 %v474
      %v982 = vunpack.c.l.b16 %v475
      %v983 = vunpack.c.h.b16 %v475
      %v984 = vunpack.c.l.b16 %v476
      %v985 = vunpack.c.l.b16 %v477
      %v986 = vunpack.c.h.b16 %v477
      %v987 = vunpack.c.l.b16 %v478
      %v988 = vunpack.c.h.b16 %v478
      %v989 = vunpack.c.l.b16 %v479
      %v990 = vunpack.c.h.b16 %v479
      %v991 = vunpack.c.l.b16 %v480
      %v992 = vunpack.c.h.b16 %v480
      %v993 = vunpack.c.l.b16 %v481
      %v994 = vunpack.c.h.b16 %v481
      %v995 = vunpack.c.l.b16 %v482
      %v996 = vunpack.c.h.b16 %v482
      %v997 = vunpack.c.l.b16 %v483
      %v998 = vunpack.c.l.b16 %v484
      %v999 = vunpack.c.h.b16 %v484
      %v1000 = vunpack.c.l.b16 %v485
      %v1001 = vunpack.c.h.b16 %v485
      %v1002 = vunpack.c.l.b16 %v486
      %v1003 = vunpack.c.h.b16 %v486
      %v1004 = vunpack.c.l.b16 %v487
      %v1005 = vunpack.c.h.b16 %v487
      %v1006 = vunpack.c.l.b16 %v488
      %v1007 = vunpack.c.h.b16 %v488
      %v1008 = vunpack.c.l.b16 %v489
      %v1009 = vunpack.c.h.b16 %v489
      %v1010 = vunpack.c.l.b16 %v490
      %v1011 = vunpack.c.l.b16 %v491
      %v1012 = vunpack.c.h.b16 %v491
      %v1013 = vunpack.c.l.b16 %v492
      %v1014 = vunpack.c.h.b16 %v492
      %v1015 = vunpack.c.l.b16 %v493
      %v1016 = vunpack.c.h.b16 %v493
      %v1017 = vunpack.c.l.b16 %v494
      %v1018 = vunpack.c.h.b16 %v494
      %v1019 = vunpack.c.l.b16 %v495
      %v1020 = vunpack.c.h.b16 %v495
      %v1021 = vunpack.c.l.b16 %v496
      %v1022 = vunpack.c.h.b16 %v496
      %v1023 = vunpack.c.l.b16 %v497
      %v1024 = vunpack.c.l.b16 %v498
      %v1025 = vunpack.c.h.b16 %v498
      %v1026 = vunpack.c.l.b16 %v499
      %v1027 = vunpack.c.h.b16 %v499
      %v1028 = vunpack.c.l.b16 %v500
      %v1029 = vunpack.c.h.b16 %v500
      %v1030 = vunpack.c.l.b16 %v501
      %v1031 = vunpack.c.h.b16 %v501
      %v1032 = vunpack.c.l.b16 %v502
      %v1033 = vunpack.c.h.b16 %v502
      %v1034 = vunpack.c.l.b16 %v503
      %v1035 = vunpack.c.h.b16 %v503
      %v1036 = vunpack.c.l.b16 %v504
      %v1037 = vunpack.c.l.b16 %v505
      %v1038 = vunpack.c.h.b16 %v505
      %v1039 = vunpack.c.l.b16 %v506
      %v1040 = vunpack.c.h.b16 %v506
      %v1041 = vunpack.c.l.b16 %v507
      %v1042 = vunpack.c.h.b16 %v507
      %v1043 = vunpack.c.l.b16 %v508
      %v1044 = vunpack.c.h.b16 %v508
      %v1045 = vunpack.c.l.b16 %v509
      %v1046 = vunpack.c.h.b16 %v509
      %v1047 = vunpack.c.l.b16 %v510
      %v1048 = vunpack.c.h.b16 %v510
      %v1049 = vunpack.c.l.b16 %v511
      %v1050 = vunpack.c.l.b16 %v512
      %v1051 = vunpack.c.h.b16 %v512
      %v1052 = vunpack.c.l.b16 %v513
      %v1053 = vunpack.c.h.b16 %v513
      %v1054 = vunpack.c.l.b16 %v514
      %v1055 = vunpack.c.h.b16 %v514
      %v1056 = vunpack.c.l.b16 %v515
      %v1057 = vunpack.c.h.b16 %v515
      %v1058 = vunpack.c.l.b16 %v516
      %v1059 = vunpack.c.h.b16 %v516
      %v1060 = vunpack.c.l.b16 %v517
      %v1061 = vunpack.c.h.b16 %v517
      %v1062 = vunpack.c.l.b16 %v518
      %v1063 = vunpack.c.l.b16 %v519
      %v1064 = vunpack.c.h.b16 %v519
      %v1065 = vunpack.c.l.b16 %v520
      %v1066 = vunpack.c.h.b16 %v520
      %v1067 = vunpack.c.l.b16 %v521
      %v1068 = vunpack.c.h.b16 %v521
      %v1069 = vunpack.c.l.b16 %v522
      %v1070 = vunpack.c.h.b16 %v522
      %v1071 = vunpack.c.l.b16 %v523
      %v1072 = vunpack.c.h.b16 %v523
      %v1073 = vunpack.c.l.b16 %v524
      %v1074 = vunpack.c.h.b16 %v524
      %v1075 = vunpack.c.l.b16 %v525
      %v1076 = vunpack.c.l.b16 %v526
      %v1077 = vunpack.c.h.b16 %v526
      %v1078 = vunpack.c.l.b16 %v527
      %v1079 = vunpack.c.h.b16 %v527
      %v1080 = vunpack.c.l.b16 %v528
      %v1081 = vunpack.c.h.b16 %v528
      %v1082 = vunpack.c.l.b16 %v529
      %v1083 = vunpack.c.h.b16 %v529
      %v1084 = vunpack.c.l.b16 %v530
      %v1085 = vunpack.c.h.b16 %v530
      %v1086 = vunpack.c.l.b16 %v531
      %v1087 = vunpack.c.h.b16 %v531
      %v1088 = vunpack.c.l.b16 %v532
      %v1089 = vunpack.c.l.b16 %v533
      %v1090 = vunpack.c.h.b16 %v533
      %v1091 = vunpack.c.l.b16 %v534
      %v1092 = vunpack.c.h.b16 %v534
      %v1093 = vunpack.c.l.b16 %v535
      %v1094 = vunpack.c.h.b16 %v535
      %v1095 = vunpack.c.l.b16 %v536
      %v1096 = vunpack.c.h.b16 %v536
      %v1097 = vunpack.c.l.b16 %v537
      %v1098 = vunpack.c.h.b16 %v537
      %v1099 = vunpack.c.l.b16 %v538
      %v1100 = vunpack.c.h.b16 %v538
      %v1101 = vunpack.c.l.b16 %v539
      %v1102 = vunpack.c.l.b16 %v540
      %v1103 = vunpack.c.h.b16 %v540
      %v1104 = vunpack.c.l.b16 %v541
      %v1105 = vunpack.c.h.b16 %v541
      %v1106 = vunpack.c.l.b16 %v542
      %v1107 = vunpack.c.h.b16 %v542
      %v1108 = vunpack.c.l.b16 %v543
      %v1109 = vunpack.c.h.b16 %v543
      %v1110 = vunpack.c.l.b16 %v544
      %v1111 = vunpack.c.h.b16 %v544
      %v1112 = vunpack.c.l.b16 %v545
      %v1113 = vunpack.c.h.b16 %v545
      %v1114 = vunpack.c.l.b16 %v546
      %v1115 = vunpack.c.l.b16 %v547
      %v1116 = vunpack.c.h.b16 %v547
      %v1117 = vunpack.c.l.b16 %v548
      %v1118 = vunpack.c.h.b16 %v548
      %v1119 = vunpack.c.l.b16 %v549
      %v1120 = vunpack.c.h.b16 %v549
      %v1121 = vunpack.c.l.b16 %v550
      %v1122 = vunpack.c.h.b16 %v550
      %v1123 = vunpack.c.l.b16 %v551
      %v1124 = vunpack.c.h.b16 %v551
      %v1125 = vunpack.c.l.b16 %v552
      %v1126 = vunpack.c.h.b16 %v552
      %v1127 = vunpack.c.l.b16 %v553
      %v1128 = vunpack.c.l.b16 %v554
      %v1129 = vunpack.c.h.b16 %v554
      %v1130 = vunpack.c.l.b16 %v555
      %v1131 = vunpack.c.h.b16 %v555
      %v1132 = vunpack.c.l.b16 %v556
      %v1133 = vunpack.c.h.b16 %v556
      %v1134 = vunpack.c.l.b16 %v557
      %v1135 = vunpack.c.h.b16 %v557
      %v1136 = vunpack.c.l.b16 %v558
      %v1137 = vunpack.c.h.b16 %v558
      %v1138 = vunpack.c.l.b16 %v559
      %v1139 = vunpack.c.h.b16 %v559
      %v1140 = vunpack.c.l.b16 %v560
      %v1141 = vunpack.c.l.b16 %v561
      %v1142 = vunpack.c.h.b16 %v561
      %v1143 = vunpack.c.l.b16 %v562
      %v1144 = vunpack.c.h.b16 %v562
      %v1145 = vunpack.c.l.b16 %v563
      %v1146 = vunpack.c.h.b16 %v563
      %v1147 = vunpack.c.l.b16 %v564
      %v1148 = vunpack.c.h.b16 %v564
      %v1149 = vunpack.c.l.b16 %v565
      %v1150 = vunpack.c.h.b16 %v565
      %v1151 = vunpack.c.l.b16 %v566
      %v1152 = vunpack.c.h.b16 %v566
      %v1153 = vunpack.c.l.b16 %v567
      %v1154 = vunpack.c.l.b16 %v568
      %v1155 = vunpack.c.h.b16 %v568
      %v1156 = vunpack.c.l.b16 %v569
      %v1157 = vunpack.c.h.b16 %v569
      %v1158 = vunpack.c.l.b16 %v570
      %v1159 = vunpack.c.h.b16 %v570
      %v1160 = vunpack.c.l.b16 %v571
      %v1161 = vunpack.c.h.b16 %v571
      %v1162 = vunpack.c.l.b16 %v572
      %v1163 = vunpack.c.h.b16 %v572
      %v1164 = vunpack.c.l.b16 %v573
      %v1165 = vunpack.c.h.b16 %v573
      %v1166 = vunpack.c.l.b16 %v574
      %v1167 = vunpack.c.l.b16 %v575
      %v1168 = vunpack.c.h.b16 %v575
      %v1169 = vunpack.c.l.b16 %v576
      %v1170 = vunpack.c.h.b16 %v576
      %v1171 = vunpack.c.l.b16 %v577
      %v1172 = vunpack.c.h.b16 %v577
      %v1173 = vunpack.c.l.b16 %v578
      %v1174 = vunpack.c.h.b16 %v578
      %v1175 = vunpack.c.l.b16 %v579
      %v1176 = vunpack.c.h.b16 %v579
      %v1177 = vunpack.c.l.b16 %v580
      %v1178 = vunpack.c.h.b16 %v580
      %v1179 = vunpack.c.l.b16 %v581
      %v1180 = vunpack.c.l.b16 %v582
      %v1181 = vunpack.c.h.b16 %v582
      %v1182 = vunpack.c.l.b16 %v583
      %v1183 = vunpack.c.h.b16 %v583
      %v1184 = vunpack.c.l.b16 %v584
      %v1185 = vunpack.c.h.b16 %v584
      %v1186 = vunpack.c.l.b16 %v585
      %v1187 = vunpack.c.h.b16 %v585
      %v1188 = vunpack.c.l.b16 %v586
      %v1189 = vunpack.c.h.b16 %v586
      %v1190 = vunpack.c.l.b16 %v587
      %v1191 = vunpack.c.h.b16 %v587
      %v1192 = vunpack.c.l.b16 %v588
      %v1193 = vunpack.c.l.b16 %v589
      %v1194 = vunpack.c.h.b16 %v589
      %v1195 = vunpack.c.l.b16 %v590
      %v1196 = vunpack.c.h.b16 %v590
      %v1197 = vunpack.c.l.b16 %v591
      %v1198 = vunpack.c.h.b16 %v591
      %v1199 = vunpack.c.l.b16 %v592
      %v1200 = vunpack.c.h.b16 %v592
      %v1201 = vunpack.c.l.b16 %v593
      %v1202 = vunpack.c.h.b16 %v593
      %v1203 = vunpack.c.l.b16 %v594
      %v1204 = vunpack.c.h.b16 %v594
      %v1205 = vunpack.c.l.b16 %v595
      %v1206 = vunpack.c.l.b16 %v596
      %v1207 = vunpack.c.h.b16 %v596
      %v1208 = vunpack.c.l.b16 %v597
      %v1209 = vunpack.c.h.b16 %v597
      %v1210 = vunpack.c.l.b16 %v598
      %v1211 = vunpack.c.h.b16 %v598
      %v1212 = vunpack.c.l.b16 %v599
      %v1213 = vunpack.c.h.b16 %v599
      %v1214 = vunpack.c.l.b16 %v600
      %v1215 = vunpack.c.h.b16 %v600
      %v1216 = vunpack.c.l.b16 %v601
      %v1217 = vunpack.c.h.b16 %v601
      %v1218 = vunpack.c.l.b16 %v602
      %v1219 = vunpack.c.l.b16 %v603
      %v1220 = vunpack.c.h.b16 %v603
      %v1221 = vunpack.c.l.b16 %v604
      %v1222 = vunpack.c.h.b16 %v604
      %v1223 = vunpack.c.l.b16 %v605
      %v1224 = vunpack.c.h.b16 %v605
      %v1225 = vunpack.c.l.b16 %v606
      %v1226 = vunpack.c.h.b16 %v606
      %v1227 = vunpack.c.l.b16 %v607
      %v1228 = vunpack.c.h.b16 %v607
      %v1229 = vunpack.c.l.b16 %v608
      %v1230 = vunpack.c.h.b16 %v608
      %v1231 = vunpack.c.l.b16 %v609
      %v1232 = vunpack.c.l.b16 %v610
      %v1233 = vunpack.c.h.b16 %v610
      %v1234 = vunpack.c.l.b16 %v611
      %v1235 = vunpack.c.h.b16 %v611
      %v1236 = vunpack.c.l.b16 %v612
      %v1237 = vunpack.c.h.b16 %v612
      %v1238 = vunpack.c.l.b16 %v613
      %v1239 = vunpack.c.h.b16 %v613
      %v1240 = vunpack.c.l.b16 %v614
      %v1241 = vunpack.c.h.b16 %v614
      %v1242 = vunpack.c.l.b16 %v615
      %v1243 = vunpack.c.h.b16 %v615
      %v1244 = vunpack.c.l.b16 %v616
      %v1245 = vunpack.c.l.b16 %v617
      %v1246 = vunpack.c.h.b16 %v617
      %v1247 = vunpack.c.l.b16 %v618
      %v1248 = vunpack.c.h.b16 %v618
      %v1249 = vunpack.c.l.b16 %v619
      %v1250 = vunpack.c.h.b16 %v619
      %v1251 = vunpack.c.l.b16 %v620
      %v1252 = vunpack.c.h.b16 %v620
      %v1253 = vunpack.c.l.b16 %v621
      %v1254 = vunpack.c.h.b16 %v621
      %v1255 = vunpack.c.l.b16 %v622
      %v1256 = vunpack.c.h.b16 %v622
      %v1257 = vunpack.c.l.b16 %v623
      %v1258 = vunpack.c.l.b16 %v624
      %v1259 = vunpack.c.h.b16 %v624
      %v1260 = vunpack.c.l.b16 %v625
      %v1261 = vunpack.c.h.b16 %v625
      %v1262 = vunpack.c.l.b16 %v626
      %v1263 = vunpack.c.h.b16 %v626
      %v1264 = vunpack.c.l.b16 %v627
      %v1265 = vunpack.c.h.b16 %v627
      %v1266 = vunpack.c.l.b16 %v628
      %v1267 = vunpack.c.h.b16 %v628
      %v1268 = vunpack.c.l.b16 %v629
      %v1269 = vunpack.c.h.b16 %v629
      %v1270 = vunpack.c.l.b16 %v630
      %v1271 = vunpack.c.l.b16 %v631
      %v1272 = vunpack.c.h.b16 %v631
      %v1273 = vunpack.c.l.b16 %v632
      %v1274 = vunpack.c.h.b16 %v632
      %v1275 = vunpack.c.l.b16 %v633
      %v1276 = vunpack.c.h.b16 %v633
      %v1277 = vunpack.c.l.b16 %v634
      %v1278 = vunpack.c.h.b16 %v634
      %v1279 = vunpack.c.l.b16 %v635
      %v1280 = vunpack.c.h.b16 %v635
      %v1281 = vunpack.c.l.b16 %v636
      %v1282 = vunpack.c.h.b16 %v636
      %v1283 = vunpack.c.l.b16 %v637
      %v1284 = vpack.c.b16 %v881, %v868
      %v1285 = vpack.c.b16 %v882, %v869
      %v1286 = vpack.c.b16 %v883, %v870
      %v1287 = vpack.c.b16 %v884, %v871
      %v1288 = vpack.c.b16 %v885, %v872
      %v1289 = vpack.c.b16 %v886, %v873
      %v1290 = vpack.c.b16 %v887, %v874
      %v1291 = vpack.c.b16 %v888, %v875
      %v1292 = vpack.c.b16 %v889, %v876
      %v1293 = vpack.c.b16 %v890, %v877
      %v1294 = vpack.c.b16 %v891, %v878
      %v1295 = vpack.c.b16 %v892, %v879
      %v1296 = vpack.c.b16 %v893, %v880
      %v1297 = vpack.c.b16 %v907, %v894
      %v1298 = vpack.c.b16 %v908, %v895
      %v1299 = vpack.c.b16 %v909, %v896
      %v1300 = vpack.c.b16 %v910, %v897
      %v1301 = vpack.c.b16 %v911, %v898
      %v1302 = vpack.c.b16 %v912, %v899
      %v1303 = vpack.c.b16 %v913, %v900
      %v1304 = vpack.c.b16 %v914, %v901
      %v1305 = vpack.c.b16 %v915, %v902
      %v1306 = vpack.c.b16 %v916, %v903
      %v1307 = vpack.c.b16 %v917, %v904
      %v1308 = vpack.c.b16 %v918, %v905
      %v1309 = vpack.c.b16 %v919, %v906
      %v1310 = vpack.c.b16 %v933, %v920
      %v1311 = vpack.c.b16 %v934, %v921
      %v1312 = vpack.c.b16 %v935, %v922
      %v1313 = vpack.c.b16 %v936, %v923
      %v1314 = vpack.c.b16 %v937, %v924
      %v1315 = vpack.c.b16 %v938, %v925
      %v1316 = vpack.c.b16 %v939, %v926
      %v1317 = vpack.c.b16 %v940, %v927
      %v1318 = vpack.c.b16 %v941, %v928
      %v1319 = vpack.c.b16 %v942, %v929
      %v1320 = vpack.c.b16 %v943, %v930
      %v1321 = vpack.c.b16 %v944, %v931
      %v1322 = vpack.c.b16 %v945, %v932
      %v1323 = vpack.c.b16 %v959, %v946
      %v1324 = vpack.c.b16 %v960, %v947
      %v1325 = vpack.c.b16 %v961, %v948
      %v1326 = vpack.c.b16 %v962, %v949
      %v1327 = vpack.c.b16 %v963, %v950
      %v1328 = vpack.c.b16 %v964, %v951
      %v1329 = vpack.c.b16 %v965, %v952
      %v1330 = vpack.c.b16 %v966, %v953
      %v1331 = vpack.c.b16 %v967, %v954
      %v1332 = vpack.c.b16 %v968, %v955
      %v1333 = vpack.c.b16 %v969, %v956
      %v1334 = vpack.c.b16 %v970, %v957
      %v1335 = vpack.c.b16 %v971, %v958
      %v1336 = vpack.c.b16 %v985, %v972
      %v1337 = vpack.c.b16 %v986, %v973
      %v1338 = vpack.c.b16 %v987, %v974
      %v1339 = vpack.c.b16 %v988, %v975
      %v1340 = vpack.c.b16 %v989, %v976
      %v1341 = vpack.c.b16 %v990, %v977
      %v1342 = vpack.c.b16 %v991, %v978
      %v1343 = vpack.c.b16 %v992, %v979
      %v1344 = vpack.c.b16 %v993, %v980
      %v1345 = vpack.c.b16 %v994, %v981
      %v1346 = vpack.c.b16 %v995, %v982
      %v1347 = vpack.c.b16 %v996, %v983
      %v1348 = vpack.c.b16 %v997, %v984
      %v1349 = vpack.c.b16 %v1011, %v998
      %v1350 = vpack.c.b16 %v1012, %v999
      %v1351 = vpack.c.b16 %v1013, %v1000
      %v1352 = vpack.c.b16 %v1014, %v1001
      %v1353 = vpack.c.b16 %v1015, %v1002
      %v1354 = vpack.c.b16 %v1016, %v1003
      %v1355 = vpack.c.b16 %v1017, %v1004
      %v1356 = vpack.c.b16 %v1018, %v1005
      %v1357 = vpack.c.b16 %v1019, %v1006
      %v1358 = vpack.c.b16 %v1020, %v1007
      %v1359 = vpack.c.b16 %v1021, %v1008
      %v1360 = vpack.c.b16 %v1022, %v1009
      %v1361 = vpack.c.b16 %v1023, %v1010
      %v1362 = vpack.c.b16 %v1037, %v1024
      %v1363 = vpack.c.b16 %v1038, %v1025
      %v1364 = vpack.c.b16 %v1039, %v1026
      %v1365 = vpack.c.b16 %v1040, %v1027
      %v1366 = vpack.c.b16 %v1041, %v1028
      %v1367 = vpack.c.b16 %v1042, %v1029
      %v1368 = vpack.c.b16 %v1043, %v1030
      %v1369 = vpack.c.b16 %v1044, %v1031
      %v1370 = vpack.c.b16 %v1045, %v1032
      %v1371 = vpack.c.b16 %v1046, %v1033
      %v1372 = vpack.c.b16 %v1047, %v1034
      %v1373 = vpack.c.b16 %v1048, %v1035
      %v1374 = vpack.c.b16 %v1049, %v1036
      %v1375 = vpack.c.b16 %v1063, %v1050
      %v1376 = vpack.c.b16 %v1064, %v1051
      %v1377 = vpack.c.b16 %v1065, %v1052
      %v1378 = vpack.c.b16 %v1066, %v1053
      %v1379 = vpack.c.b16 %v1067, %v1054
      %v1380 = vpack.c.b16 %v1068, %v1055
      %v1381 = vpack.c.b16 %v1069, %v1056
      %v1382 = vpack.c.b16 %v1070, %v1057
      %v1383 = vpack.c.b16 %v1071, %v1058
      %v1384 = vpack.c.b16 %v1072, %v1059
      %v1385 = vpack.c.b16 %v1073, %v1060
      %v1386 = vpack.c.b16 %v1074, %v1061
      %v1387 = vpack.c.b16 %v1075, %v1062
      %v1388 = vpack.c.b16 %v1089, %v1076
      %v1389 = vpack.c.b16 %v1090, %v1077
      %v1390 = vpack.c.b16 %v1091, %v1078
      %v1391 = vpack.c.b16 %v1092, %v1079
      %v1392 = vpack.c.b16 %v1093, %v1080
      %v1393 = vpack.c.b16 %v1094, %v1081
      %v1394 = vpack.c.b16 %v1095, %v1082
      %v1395 = vpack.c.b16 %v1096, %v1083
      %v1396 = vpack.c.b16 %v1097, %v1084
      %v1397 = vpack.c.b16 %v1098, %v1085
      %v1398 = vpack.c.b16 %v1099, %v1086
      %v1399 = vpack.c.b16 %v1100, %v1087
      %v1400 = vpack.c.b16 %v1101, %v1088
      %v1401 = vpack.c.b16 %v1115, %v1102
      %v1402 = vpack.c.b16 %v1116, %v1103
      %v1403 = vpack.c.b16 %v1117, %v1104
      %v1404 = vpack.c.b16 %v1118, %v1105
      %v1405 = vpack.c.b16 %v1119, %v1106
      %v1406 = vpack.c.b16 %v1120, %v1107
      %v1407 = vpack.c.b16 %v1121, %v1108
      %v1408 = vpack.c.b16 %v1122, %v1109
      %v1409 = vpack.c.b16 %v1123, %v1110
      %v1410 = vpack.c.b16 %v1124, %v1111
      %v1411 = vpack.c.b16 %v1125, %v1112
      %v1412 = vpack.c.b16 %v1126, %v1113
      %v1413 = vpack.c.b16 %v1127, %v1114
      %v1414 = vpack.c.b16 %v1141, %v1128
      %v1415 = vpack.c.b16 %v1142, %v1129
      %v1416 = vpack.c.b16 %v1143, %v1130
      %v1417 = vpack.c.b16 %v1144, %v1131
      %v1418 = vpack.c.b16 %v1145, %v1132
      %v1419 = vpack.c.b16 %v1146, %v1133
      %v1420 = vpack.c.b16 %v1147, %v1134
      %v1421 = vpack.c.b16 %v1148, %v1135
      %v1422 = vpack.c.b16 %v1149, %v1136
      %v1423 = vpack.c.b16 %v1150, %v1137
      %v1424 = vpack.c.b16 %v1151, %v1138
      %v1425 = vpack.c.b16 %v1152, %v1139
      %v1426 = vpack.c.b16 %v1153, %v1140
      %v1427 = vpack.c.b16 %v1167, %v1154
      %v1428 = vpack.c.b16 %v1168, %v1155
      %v1429 = vpack.c.b16 %v1169, %v1156
      %v1430 = vpack.c.b16 %v1170, %v1157
      %v1431 = vpack.c.b16 %v1171, %v1158
      %v1432 = vpack.c.b16 %v1172, %v1159
      %v1433 = vpack.c.b16 %v1173, %v1160
      %v1434 = vpack.c.b16 %v1174, %v1161
      %v1435 = vpack.c.b16 %v1175, %v1162
      %v1436 = vpack.c.b16 %v1176, %v1163
      %v1437 = vpack.c.b16 %v1177, %v1164
      %v1438 = vpack.c.b16 %v1178, %v1165
      %v1439 = vpack.c.b16 %v1179, %v1166
      %v1440 = vpack.c.b16 %v1193, %v1180
      %v1441 = vpack.c.b16 %v1194, %v1181
      %v1442 = vpack.c.b16 %v1195, %v1182
      %v1443 = vpack.c.b16 %v1196, %v1183
      %v1444 = vpack.c.b16 %v1197, %v1184
      %v1445 = vpack.c.b16 %v1198, %v1185
      %v1446 = vpack.c.b16 %v1199, %v1186
      %v1447 = vpack.c.b16 %v1200, %v1187
      %v1448 = vpack.c.b16 %v1201, %v1188
      %v1449 = vpack.c.b16 %v1202, %v1189
      %v1450 = vpack.c.b16 %v1203, %v1190
      %v1451 = vpack.c.b16 %v1204, %v1191
      %v1452 = vpack.c.b16 %v1205, %v1192
      %v1453 = vpack.c.b16 %v1219, %v1206
      %v1454 = vpack.c.b16 %v1220, %v1207
      %v1455 = vpack.c.b16 %v1221, %v1208
      %v1456 = vpack.c.b16 %v1222, %v1209
      %v1457 = vpack.c.b16 %v1223, %v1210
      %v1458 = vpack.c.b16 %v1224, %v1211
      %v1459 = vpack.c.b16 %v1225, %v1212
      %v1460 = vpack.c.b16 %v1226, %v1213
      %v1461 = vpack.c.b16 %v1227, %v1214
      %v1462 = vpack.c.b16 %v1228, %v1215
      %v1463 = vpack.c.b16 %v1229, %v1216
      %v1464 = vpack.c.b16 %v1230, %v1217
      %v1465 = vpack.c.b16 %v1231, %v1218
      %v1466 = vpack.c.b16 %v1245, %v1232
      %v1467 = vpack.c.b16 %v1246, %v1233
      %v1468 = vpack.c.b16 %v1247, %v1234
      %v1469 = vpack.c.b16 %v1248, %v1235
      %v1470 = vpack.c.b16 %v1249, %v1236
      %v1471 = vpack.c.b16 %v1250, %v1237
      %v1472 = vpack.c.b16 %v1251, %v1238
      %v1473 = vpack.c.b16 %v1252, %v1239
      %v1474 = vpack.c.b16 %v1253, %v1240
      %v1475 = vpack.c.b16 %v1254, %v1241
      %v1476 = vpack.c.b16 %v1255, %v1242
      %v1477 = vpack.c.b16 %v1256, %v1243
      %v1478 = vpack.c.b16 %v1257, %v1244
      %v1479 = vpack.c.b16 %v1271, %v1258
      %v1480 = vpack.c.b16 %v1272, %v1259
      %v1481 = vpack.c.b16 %v1273, %v1260
      %v1482 = vpack.c.b16 %v1274, %v1261
      %v1483 = vpack.c.b16 %v1275, %v1262
      %v1484 = vpack.c.b16 %v1276, %v1263
      %v1485 = vpack.c.b16 %v1277, %v1264
      %v1486 = vpack.c.b16 %v1278, %v1265
      %v1487 = vpack.c.b16 %v1279, %v1266
      %v1488 = vpack.c.b16 %v1280, %v1267
      %v1489 = vpack.c.b16 %v1281, %v1268
      %v1490 = vpack.c.b16 %v1282, %v1269
      %v1491 = vpack.c.b16 %v1283, %v1270
      %1700 = vmatpush.bf16.msra.mxu0 %v1375
      %1701 = vmatpush.bf16.msra.mxu0 %v1362
      %1702 = vmatpush.bf16.msra.mxu0 %v1349
      %1703 = vmatpush.bf16.msra.mxu0 %v1336
      %1704 = vmatpush.bf16.msra.mxu0 %v1323
      %1705 = vmatpush.bf16.msra.mxu0 %v1310
      %1706 = vmatpush.bf16.msra.mxu0 %v1297
      %1707 = vmatpush.bf16.msra.mxu0 %v1284
      %1708 = vmatmul.bf16.gmra.mxu0 %v640
      %v1709 = vpop.f32.mrf.mxu0
      %v1710 = vadd.f32 0.0, %v1709
      %v1711 = vpop.f32.mrf.mxu0
      %1712 = vdwg.mxu0
      %1713 = vmatpush.bf16.msra.mxu0 %v1479
      %1714 = vmatpush.bf16.msra.mxu0 %v1466
      %1715 = vmatpush.bf16.msra.mxu0 %v1453
      %1716 = vmatpush.bf16.msra.mxu0 %v1440
      %1717 = vmatpush.bf16.msra.mxu0 %v1427
      %1718 = vmatpush.bf16.msra.mxu0 %v1414
      %1719 = vmatpush.bf16.msra.mxu0 %v1401
      %1720 = vmatpush.bf16.msra.mxu0 %v1388
      %1721 = vmatmul.bf16.gmra.mxu0 %v641
      %v1722 = vpop.f32.mrf.mxu0
      %v1723 = vadd.f32 %v1710, %v1722
      %v1724 = vpop.f32.mrf.mxu0
      %1725 = vdwg.mxu0
      %1726 = vmatpush.bf16.msra.mxu0 %v1376
      %1727 = vmatpush.bf16.msra.mxu0 %v1363
      %1728 = vmatpush.bf16.msra.mxu0 %v1350
      %1729 = vmatpush.bf16.msra.mxu0 %v1337
      %1730 = vmatpush.bf16.msra.mxu0 %v1324
      %1731 = vmatpush.bf16.msra.mxu0 %v1311
      %1732 = vmatpush.bf16.msra.mxu0 %v1298
      %1733 = vmatpush.bf16.msra.mxu0 %v1285
      %1734 = vmatmul.bf16.gmra.mxu0 %v640
      %v1735 = vpop.f32.mrf.mxu0
      %v1736 = vadd.f32 0.0, %v1735
      %v1737 = vpop.f32.mrf.mxu0
      %1738 = vdwg.mxu0
      %1739 = vmatpush.bf16.msra.mxu0 %v1480
      %1740 = vmatpush.bf16.msra.mxu0 %v1467
      %1741 = vmatpush.bf16.msra.mxu0 %v1454
      %1742 = vmatpush.bf16.msra.mxu0 %v1441
      %1743 = vmatpush.bf16.msra.mxu0 %v1428
      %1744 = vmatpush.bf16.msra.mxu0 %v1415
      %1745 = vmatpush.bf16.msra.mxu0 %v1402
      %1746 = vmatpush.bf16.msra.mxu0 %v1389
      %1747 = vmatmul.bf16.gmra.mxu0 %v641
      %v1748 = vpop.f32.mrf.mxu0
      %v1749 = vadd.f32 %v1736, %v1748
      %v1750 = vpop.f32.mrf.mxu0
      %1751 = vdwg.mxu0
      %1752 = vmatpush.bf16.msra.mxu0 %v1377
      %1753 = vmatpush.bf16.msra.mxu0 %v1364
      %1754 = vmatpush.bf16.msra.mxu0 %v1351
      %1755 = vmatpush.bf16.msra.mxu0 %v1338
      %1756 = vmatpush.bf16.msra.mxu0 %v1325
      %1757 = vmatpush.bf16.msra.mxu0 %v1312
      %1758 = vmatpush.bf16.msra.mxu0 %v1299
      %1759 = vmatpush.bf16.msra.mxu0 %v1286
      %1760 = vmatmul.bf16.gmra.mxu0 %v640
      %v1761 = vpop.f32.mrf.mxu0
      %v1762 = vadd.f32 0.0, %v1761
      %v1763 = vpop.f32.mrf.mxu0
      %1764 = vdwg.mxu0
      %1765 = vmatpush.bf16.msra.mxu0 %v1481
      %1766 = vmatpush.bf16.msra.mxu0 %v1468
      %1767 = vmatpush.bf16.msra.mxu0 %v1455
      %1768 = vmatpush.bf16.msra.mxu0 %v1442
      %1769 = vmatpush.bf16.msra.mxu0 %v1429
      %1770 = vmatpush.bf16.msra.mxu0 %v1416
      %1771 = vmatpush.bf16.msra.mxu0 %v1403
      %1772 = vmatpush.bf16.msra.mxu0 %v1390
      %1773 = vmatmul.bf16.gmra.mxu0 %v641
      %v1774 = vpop.f32.mrf.mxu0
      %v1775 = vadd.f32 %v1762, %v1774
      %v1776 = vpop.f32.mrf.mxu0
      %1777 = vdwg.mxu0
      %1778 = vmatpush.bf16.msra.mxu0 %v1378
      %1779 = vmatpush.bf16.msra.mxu0 %v1365
      %1780 = vmatpush.bf16.msra.mxu0 %v1352
      %1781 = vmatpush.bf16.msra.mxu0 %v1339
      %1782 = vmatpush.bf16.msra.mxu0 %v1326
      %1783 = vmatpush.bf16.msra.mxu0 %v1313
      %1784 = vmatpush.bf16.msra.mxu0 %v1300
      %1785 = vmatpush.bf16.msra.mxu0 %v1287
      %1786 = vmatmul.bf16.gmra.mxu0 %v640
      %v1787 = vpop.f32.mrf.mxu0
      %v1788 = vadd.f32 0.0, %v1787
      %v1789 = vpop.f32.mrf.mxu0
      %1790 = vdwg.mxu0
      %1791 = vmatpush.bf16.msra.mxu0 %v1482
      %1792 = vmatpush.bf16.msra.mxu0 %v1469
      %1793 = vmatpush.bf16.msra.mxu0 %v1456
      %1794 = vmatpush.bf16.msra.mxu0 %v1443
      %1795 = vmatpush.bf16.msra.mxu0 %v1430
      %1796 = vmatpush.bf16.msra.mxu0 %v1417
      %1797 = vmatpush.bf16.msra.mxu0 %v1404
      %1798 = vmatpush.bf16.msra.mxu0 %v1391
      %1799 = vmatmul.bf16.gmra.mxu0 %v641
      %v1800 = vpop.f32.mrf.mxu0
      %v1801 = vadd.f32 %v1788, %v1800
      %v1802 = vpop.f32.mrf.mxu0
      %1803 = vdwg.mxu0
      %1804 = vmatpush.bf16.msra.mxu0 %v1379
      %1805 = vmatpush.bf16.msra.mxu0 %v1366
      %1806 = vmatpush.bf16.msra.mxu0 %v1353
      %1807 = vmatpush.bf16.msra.mxu0 %v1340
      %1808 = vmatpush.bf16.msra.mxu0 %v1327
      %1809 = vmatpush.bf16.msra.mxu0 %v1314
      %1810 = vmatpush.bf16.msra.mxu0 %v1301
      %1811 = vmatpush.bf16.msra.mxu0 %v1288
      %1812 = vmatmul.bf16.gmra.mxu0 %v640
      %v1813 = vpop.f32.mrf.mxu0
      %v1814 = vadd.f32 0.0, %v1813
      %v1815 = vpop.f32.mrf.mxu0
      %1816 = vdwg.mxu0
      %1817 = vmatpush.bf16.msra.mxu0 %v1483
      %1818 = vmatpush.bf16.msra.mxu0 %v1470
      %1819 = vmatpush.bf16.msra.mxu0 %v1457
      %1820 = vmatpush.bf16.msra.mxu0 %v1444
      %1821 = vmatpush.bf16.msra.mxu0 %v1431
      %1822 = vmatpush.bf16.msra.mxu0 %v1418
      %1823 = vmatpush.bf16.msra.mxu0 %v1405
      %1824 = vmatpush.bf16.msra.mxu0 %v1392
      %1825 = vmatmul.bf16.gmra.mxu0 %v641
      %v1826 = vpop.f32.mrf.mxu0
      %v1827 = vadd.f32 %v1814, %v1826
      %v1828 = vpop.f32.mrf.mxu0
      %1829 = vdwg.mxu0
      %1830 = vmatpush.bf16.msra.mxu0 %v1380
      %1831 = vmatpush.bf16.msra.mxu0 %v1367
      %1832 = vmatpush.bf16.msra.mxu0 %v1354
      %1833 = vmatpush.bf16.msra.mxu0 %v1341
      %1834 = vmatpush.bf16.msra.mxu0 %v1328
      %1835 = vmatpush.bf16.msra.mxu0 %v1315
      %1836 = vmatpush.bf16.msra.mxu0 %v1302
      %1837 = vmatpush.bf16.msra.mxu0 %v1289
      %1838 = vmatmul.bf16.gmra.mxu0 %v640
      %v1839 = vpop.f32.mrf.mxu0
      %v1840 = vadd.f32 0.0, %v1839
      %v1841 = vpop.f32.mrf.mxu0
      %1842 = vdwg.mxu0
      %1843 = vmatpush.bf16.msra.mxu0 %v1484
      %1844 = vmatpush.bf16.msra.mxu0 %v1471
      %1845 = vmatpush.bf16.msra.mxu0 %v1458
      %1846 = vmatpush.bf16.msra.mxu0 %v1445
      %1847 = vmatpush.bf16.msra.mxu0 %v1432
      %1848 = vmatpush.bf16.msra.mxu0 %v1419
      %1849 = vmatpush.bf16.msra.mxu0 %v1406
      %1850 = vmatpush.bf16.msra.mxu0 %v1393
      %1851 = vmatmul.bf16.gmra.mxu0 %v641
      %v1852 = vpop.f32.mrf.mxu0
      %v1853 = vadd.f32 %v1840, %v1852
      %v1854 = vpop.f32.mrf.mxu0
      %1855 = vdwg.mxu0
      %1856 = vmatpush.bf16.msra.mxu0 %v1381
      %1857 = vmatpush.bf16.msra.mxu0 %v1368
      %1858 = vmatpush.bf16.msra.mxu0 %v1355
      %1859 = vmatpush.bf16.msra.mxu0 %v1342
      %1860 = vmatpush.bf16.msra.mxu0 %v1329
      %1861 = vmatpush.bf16.msra.mxu0 %v1316
      %1862 = vmatpush.bf16.msra.mxu0 %v1303
      %1863 = vmatpush.bf16.msra.mxu0 %v1290
      %1864 = vmatmul.bf16.gmra.mxu0 %v640
      %v1865 = vpop.f32.mrf.mxu0
      %v1866 = vadd.f32 0.0, %v1865
      %v1867 = vpop.f32.mrf.mxu0
      %1868 = vdwg.mxu0
      %1869 = vmatpush.bf16.msra.mxu0 %v1485
      %1870 = vmatpush.bf16.msra.mxu0 %v1472
      %1871 = vmatpush.bf16.msra.mxu0 %v1459
      %1872 = vmatpush.bf16.msra.mxu0 %v1446
      %1873 = vmatpush.bf16.msra.mxu0 %v1433
      %1874 = vmatpush.bf16.msra.mxu0 %v1420
      %1875 = vmatpush.bf16.msra.mxu0 %v1407
      %1876 = vmatpush.bf16.msra.mxu0 %v1394
      %1877 = vmatmul.bf16.gmra.mxu0 %v641
      %v1878 = vpop.f32.mrf.mxu0
      %v1879 = vadd.f32 %v1866, %v1878
      %v1880 = vpop.f32.mrf.mxu0
      %1881 = vdwg.mxu0
      %1882 = vmatpush.bf16.msra.mxu0 %v1382
      %1883 = vmatpush.bf16.msra.mxu0 %v1369
      %1884 = vmatpush.bf16.msra.mxu0 %v1356
      %1885 = vmatpush.bf16.msra.mxu0 %v1343
      %1886 = vmatpush.bf16.msra.mxu0 %v1330
      %1887 = vmatpush.bf16.msra.mxu0 %v1317
      %1888 = vmatpush.bf16.msra.mxu0 %v1304
      %1889 = vmatpush.bf16.msra.mxu0 %v1291
      %1890 = vmatmul.bf16.gmra.mxu0 %v640
      %v1891 = vpop.f32.mrf.mxu0
      %v1892 = vadd.f32 0.0, %v1891
      %v1893 = vpop.f32.mrf.mxu0
      %1894 = vdwg.mxu0
      %1895 = vmatpush.bf16.msra.mxu0 %v1486
      %1896 = vmatpush.bf16.msra.mxu0 %v1473
      %1897 = vmatpush.bf16.msra.mxu0 %v1460
      %1898 = vmatpush.bf16.msra.mxu0 %v1447
      %1899 = vmatpush.bf16.msra.mxu0 %v1434
      %1900 = vmatpush.bf16.msra.mxu0 %v1421
      %1901 = vmatpush.bf16.msra.mxu0 %v1408
      %1902 = vmatpush.bf16.msra.mxu0 %v1395
      %1903 = vmatmul.bf16.gmra.mxu0 %v641
      %v1904 = vpop.f32.mrf.mxu0
      %v1905 = vadd.f32 %v1892, %v1904
      %v1906 = vpop.f32.mrf.mxu0
      %1907 = vdwg.mxu0
      %1908 = vmatpush.bf16.msra.mxu0 %v1383
      %1909 = vmatpush.bf16.msra.mxu0 %v1370
      %1910 = vmatpush.bf16.msra.mxu0 %v1357
      %1911 = vmatpush.bf16.msra.mxu0 %v1344
      %1912 = vmatpush.bf16.msra.mxu0 %v1331
      %1913 = vmatpush.bf16.msra.mxu0 %v1318
      %1914 = vmatpush.bf16.msra.mxu0 %v1305
      %1915 = vmatpush.bf16.msra.mxu0 %v1292
      %1916 = vmatmul.bf16.gmra.mxu0 %v640
      %v1917 = vpop.f32.mrf.mxu0
      %v1918 = vadd.f32 0.0, %v1917
      %v1919 = vpop.f32.mrf.mxu0
      %1920 = vdwg.mxu0
      %1921 = vmatpush.bf16.msra.mxu0 %v1487
      %1922 = vmatpush.bf16.msra.mxu0 %v1474
      %1923 = vmatpush.bf16.msra.mxu0 %v1461
      %1924 = vmatpush.bf16.msra.mxu0 %v1448
      %1925 = vmatpush.bf16.msra.mxu0 %v1435
      %1926 = vmatpush.bf16.msra.mxu0 %v1422
      %1927 = vmatpush.bf16.msra.mxu0 %v1409
      %1928 = vmatpush.bf16.msra.mxu0 %v1396
      %1929 = vmatmul.bf16.gmra.mxu0 %v641
      %v1930 = vpop.f32.mrf.mxu0
      %v1931 = vadd.f32 %v1918, %v1930
      %v1932 = vpop.f32.mrf.mxu0
      %1933 = vdwg.mxu0
      %1934 = vmatpush.bf16.msra.mxu0 %v1384
      %1935 = vmatpush.bf16.msra.mxu0 %v1371
      %1936 = vmatpush.bf16.msra.mxu0 %v1358
      %1937 = vmatpush.bf16.msra.mxu0 %v1345
      %1938 = vmatpush.bf16.msra.mxu0 %v1332
      %1939 = vmatpush.bf16.msra.mxu0 %v1319
      %1940 = vmatpush.bf16.msra.mxu0 %v1306
      %1941 = vmatpush.bf16.msra.mxu0 %v1293
      %1942 = vmatmul.bf16.gmra.mxu0 %v640
      %v1943 = vpop.f32.mrf.mxu0
      %v1944 = vadd.f32 0.0, %v1943
      %v1945 = vpop.f32.mrf.mxu0
      %1946 = vdwg.mxu0
      %1947 = vmatpush.bf16.msra.mxu0 %v1488
      %1948 = vmatpush.bf16.msra.mxu0 %v1475
      %1949 = vmatpush.bf16.msra.mxu0 %v1462
      %1950 = vmatpush.bf16.msra.mxu0 %v1449
      %1951 = vmatpush.bf16.msra.mxu0 %v1436
      %1952 = vmatpush.bf16.msra.mxu0 %v1423
      %1953 = vmatpush.bf16.msra.mxu0 %v1410
      %1954 = vmatpush.bf16.msra.mxu0 %v1397
      %1955 = vmatmul.bf16.gmra.mxu0 %v641
      %v1956 = vpop.f32.mrf.mxu0
      %v1957 = vadd.f32 %v1944, %v1956
      %v1958 = vpop.f32.mrf.mxu0
      %1959 = vdwg.mxu0
      %1960 = vmatpush.bf16.msra.mxu0 %v1385
      %1961 = vmatpush.bf16.msra.mxu0 %v1372
      %1962 = vmatpush.bf16.msra.mxu0 %v1359
      %1963 = vmatpush.bf16.msra.mxu0 %v1346
      %1964 = vmatpush.bf16.msra.mxu0 %v1333
      %1965 = vmatpush.bf16.msra.mxu0 %v1320
      %1966 = vmatpush.bf16.msra.mxu0 %v1307
      %1967 = vmatpush.bf16.msra.mxu0 %v1294
      %1968 = vmatmul.bf16.gmra.mxu0 %v640
      %v1969 = vpop.f32.mrf.mxu0
      %v1970 = vadd.f32 0.0, %v1969
      %v1971 = vpop.f32.mrf.mxu0
      %1972 = vdwg.mxu0
      %1973 = vmatpush.bf16.msra.mxu0 %v1489
      %1974 = vmatpush.bf16.msra.mxu0 %v1476
      %1975 = vmatpush.bf16.msra.mxu0 %v1463
      %1976 = vmatpush.bf16.msra.mxu0 %v1450
      %1977 = vmatpush.bf16.msra.mxu0 %v1437
      %1978 = vmatpush.bf16.msra.mxu0 %v1424
      %1979 = vmatpush.bf16.msra.mxu0 %v1411
      %1980 = vmatpush.bf16.msra.mxu0 %v1398
      %1981 = vmatmul.bf16.gmra.mxu0 %v641
      %v1982 = vpop.f32.mrf.mxu0
      %v1983 = vadd.f32 %v1970, %v1982
      %v1984 = vpop.f32.mrf.mxu0
      %1985 = vdwg.mxu0
      %1986 = vmatpush.bf16.msra.mxu0 %v1386
      %1987 = vmatpush.bf16.msra.mxu0 %v1373
      %1988 = vmatpush.bf16.msra.mxu0 %v1360
      %1989 = vmatpush.bf16.msra.mxu0 %v1347
      %1990 = vmatpush.bf16.msra.mxu0 %v1334
      %1991 = vmatpush.bf16.msra.mxu0 %v1321
      %1992 = vmatpush.bf16.msra.mxu0 %v1308
      %1993 = vmatpush.bf16.msra.mxu0 %v1295
      %1994 = vmatmul.bf16.gmra.mxu0 %v640
      %v1995 = vpop.f32.mrf.mxu0
      %v1996 = vadd.f32 0.0, %v1995
      %v1997 = vpop.f32.mrf.mxu0
      %1998 = vdwg.mxu0
      %1999 = vmatpush.bf16.msra.mxu0 %v1490
      %2000 = vmatpush.bf16.msra.mxu0 %v1477
      %2001 = vmatpush.bf16.msra.mxu0 %v1464
      %2002 = vmatpush.bf16.msra.mxu0 %v1451
      %2003 = vmatpush.bf16.msra.mxu0 %v1438
      %2004 = vmatpush.bf16.msra.mxu0 %v1425
      %2005 = vmatpush.bf16.msra.mxu0 %v1412
      %2006 = vmatpush.bf16.msra.mxu0 %v1399
      %2007 = vmatmul.bf16.gmra.mxu0 %v641
      %v2008 = vpop.f32.mrf.mxu0
      %v2009 = vadd.f32 %v1996, %v2008
      %v2010 = vpop.f32.mrf.mxu0
      %2011 = vdwg.mxu0
      %2012 = vmatpush.bf16.msra.mxu0 %v1387
      %2013 = vmatpush.bf16.msra.mxu0 %v1374
      %2014 = vmatpush.bf16.msra.mxu0 %v1361
      %2015 = vmatpush.bf16.msra.mxu0 %v1348
      %2016 = vmatpush.bf16.msra.mxu0 %v1335
      %2017 = vmatpush.bf16.msra.mxu0 %v1322
      %2018 = vmatpush.bf16.msra.mxu0 %v1309
      %2019 = vmatpush.bf16.msra.mxu0 %v1296
      %2020 = vmatmul.bf16.gmra.mxu0 %v640
      %v2021 = vpop.f32.mrf.mxu0
      %v2022 = vadd.f32 0.0, %v2021
      %v2023 = vpop.f32.mrf.mxu0
      %2024 = vdwg.mxu0
      %2025 = vmatpush.bf16.msra.mxu0 %v1491
      %2026 = vmatpush.bf16.msra.mxu0 %v1478
      %2027 = vmatpush.bf16.msra.mxu0 %v1465
      %2028 = vmatpush.bf16.msra.mxu0 %v1452
      %2029 = vmatpush.bf16.msra.mxu0 %v1439
      %2030 = vmatpush.bf16.msra.mxu0 %v1426
      %2031 = vmatpush.bf16.msra.mxu0 %v1413
      %2032 = vmatpush.bf16.msra.mxu0 %v1400
      %2033 = vmatmul.bf16.gmra.mxu0 %v641
      %v2034 = vpop.f32.mrf.mxu0
      %v2035 = vadd.f32 %v2022, %v2034
      %v2036 = vpop.f32.mrf.mxu0
      %2037 = vdwg.mxu0
      %v2039 = vrot.slane %v1723, 5
      %2040 = vrot.lane.b32.xlu0 %v2039, 64
      %v2041 = vpop.permute.xlu0 %2040
      %v2044 = vrot.slane %v1749, 2
      %v2046 = vrot.slane %v1749, 7
      %2047 = vrot.lane.b32.xlu0 %v2046, 64
      %v2048 = vpop.permute.xlu0 %2047
      %v2051 = vrot.slane %v1775, 4
      %v2053 = vrot.slane %v1775, 1
      %2054 = vrot.lane.b32.xlu0 %v2053, 64
      %v2055 = vpop.permute.xlu0 %2054
      %v2058 = vrot.slane %v1801, 6
      %v2060 = vrot.slane %v1801, 3
      %2061 = vrot.lane.b32.xlu0 %v2060, 64
      %v2062 = vpop.permute.xlu0 %2061
      %v2065 = vrot.slane %v1827, 5
      %2066 = vrot.lane.b32.xlu0 %v2065, 64
      %v2067 = vpop.permute.xlu0 %2066
      %v2070 = vrot.slane %v1853, 2
      %v2072 = vrot.slane %v1853, 7
      %2073 = vrot.lane.b32.xlu0 %v2072, 64
      %v2074 = vpop.permute.xlu0 %2073
      %v2077 = vrot.slane %v1879, 4
      %v2079 = vrot.slane %v1879, 1
      %2080 = vrot.lane.b32.xlu0 %v2079, 64
      %v2081 = vpop.permute.xlu0 %2080
      %v2084 = vrot.slane %v1905, 6
      %v2086 = vrot.slane %v1905, 3
      %2087 = vrot.lane.b32.xlu0 %v2086, 64
      %v2088 = vpop.permute.xlu0 %2087
      %vm2090 = vcmask 1042432
      %v2091 = vsel %vm2090, %v1723, %v2041
      %vm2092 = vcmask 1045504
      %v2093 = vsel %vm2092, %v2091, %v2044
      %vm2094 = vcmask 1040384
      %v2095 = vsel %vm2094, %v2044, %v2048
      %vm2096 = vcmask 1043456
      %v2097 = vsel %vm2096, %v2095, %v2051
      %vm2098 = vcmask 1046528
      %v2099 = vsel %vm2098, %v2097, %v2055
      %vm2100 = vcmask 1041408
      %v2101 = vsel %vm2100, %v2055, %v2058
      %vm2102 = vcmask 1044480
      %v2103 = vsel %vm2102, %v2101, %v2062
      %v2104 = vsel %vm2090, %v1827, %v2067
      %v2105 = vsel %vm2092, %v2104, %v2070
      %v2106 = vsel %vm2094, %v2070, %v2074
      %v2107 = vsel %vm2096, %v2106, %v2077
      %v2108 = vsel %vm2098, %v2107, %v2081
      %v2109 = vsel %vm2100, %v2081, %v2084
      %v2110 = vsel %vm2102, %v2109, %v2088
      %v2112 = vrot.slane %v1931, 5
      %2113 = vrot.lane.b32.xlu0 %v2112, 64
      %v2114 = vpop.permute.xlu0 %2113
      %v2117 = vrot.slane %v1957, 2
      %v2119 = vrot.slane %v1957, 7
      %2120 = vrot.lane.b32.xlu0 %v2119, 64
      %v2121 = vpop.permute.xlu0 %2120
      %v2124 = vrot.slane %v1983, 4
      %v2126 = vrot.slane %v1983, 1
      %2127 = vrot.lane.b32.xlu0 %v2126, 64
      %v2128 = vpop.permute.xlu0 %2127
      %v2131 = vrot.slane %v2009, 6
      %v2133 = vrot.slane %v2009, 3
      %2134 = vrot.lane.b32.xlu0 %v2133, 64
      %v2135 = vpop.permute.xlu0 %2134
      %v2137 = vsel %vm2090, %v1931, %v2114
      %v2138 = vsel %vm2092, %v2137, %v2117
      %v2139 = vsel %vm2094, %v2117, %v2121
      %v2140 = vsel %vm2096, %v2139, %v2124
      %v2141 = vsel %vm2098, %v2140, %v2128
      %v2142 = vsel %vm2100, %v2128, %v2131
      %v2143 = vsel %vm2102, %v2142, %v2135
      %v2144 = vpack.c.bf16 %v2099, %v2093
      %v2145 = vpack.c.bf16 %v2105, %v2103
      %v2146 = vpack.c.bf16 %v2110, %v2108
      %v2147 = vpack.c.bf16 %v2141, %v2138
      %v2148 = vpack.c.bf16 %v2035, %v2143
      %v2149 = vld [vmem:[%s2] sm:$0xf]
      %v2150 = vld [vmem:[%s3] sm:$0xff]
      %2152 = vset.pattern.permute.xlu0 0
      %2153 = vperm.xlu0 %2152, %v2150
      %v2154 = vpop.permute.xlu0 %2153
      %vm2156 = vcmask 613376
      %v2158 = vsel %vm2156, %v2149, 0
      %v2160 = vsel %vm2102, 4294967295, 65535
      %v2161 = vsel %vm2092, %v2160, 0
      %v2163 = vand.u32 %v2148, %v2161
      %2165 = vmatpush.bf16.msra.mxu0 0
      %2166 = vmatpush.bf16.msra.mxu0 0
      %2167 = vmatpush.bf16.msra.mxu0 0
      %2168 = vmatpush.bf16.msra.mxu0 %v2163
      %2169 = vmatpush.bf16.msra.mxu0 %v2147
      %2170 = vmatpush.bf16.msra.mxu0 %v2146
      %2171 = vmatpush.bf16.msra.mxu0 %v2145
      %2172 = vmatpush.bf16.msra.mxu0 %v2144
      %2173 = vmatmul.bf16.gmra.mxu0 %v2158
      %v2174 = vpop.f32.mrf.mxu0
      %v2175 = vadd.f32 %v2154, %v2174
      %v2176 = vpop.f32.mrf.mxu0
      %2177 = vdwg.mxu0
      %vm2178 = vcmp.gt.f32.partialorder %v2175, 0.0
      %v2179 = vmul.f32 %v2175, 0.2
      %v2180 = vsel %vm2178, %v2175, %v2179
      %v2181 = vpack.c.bf16 %v2180, %v2180
      %v2182 = vld [vmem:[%s4] sm:$0xff]
      %v2183 = vld [vmem:[%s4 + $0x8] sm:$0xff]
      %v2184 = vld [vmem:[%s4 + $0x10] sm:$0xff]
      %v2185 = vld [vmem:[%s4 + $0x18] sm:$0xff]
      %v2186 = vld [vmem:[%s4 + $0x20] sm:$0xff]
      %v2187 = vld [vmem:[%s4 + $0x28] sm:$0xff]
      %v2188 = vld [vmem:[%s4 + $0x30] sm:$0xff]
      %v2189 = vld [vmem:[%s4 + $0x38] sm:$0xff]
      %v2190 = vld [vmem:[%s4 + $0x40] sm:$0xff]
      %v2191 = vld [vmem:[%s4 + $0x48] sm:$0xff]
      %v2192 = vld [vmem:[%s4 + $0x50] sm:$0xff]
      %v2193 = vld [vmem:[%s4 + $0x58] sm:$0xff]
      %v2194 = vld [vmem:[%s4 + $0x60] sm:$0xff]
      %v2195 = vld [vmem:[%s4 + $0x68] sm:$0xff]
      %v2196 = vld [vmem:[%s4 + $0x70] sm:$0xff]
      %v2197 = vld [vmem:[%s4 + $0x78] sm:$0xff]
      %v2214 = vunpack.c.l.b16 %v2182
      %v2215 = vunpack.c.h.b16 %v2182
      %v2216 = vunpack.c.l.b16 %v2183
      %v2217 = vunpack.c.h.b16 %v2183
      %v2218 = vunpack.c.l.b16 %v2184
      %v2219 = vunpack.c.h.b16 %v2184
      %v2220 = vunpack.c.l.b16 %v2185
      %v2221 = vunpack.c.h.b16 %v2185
      %v2222 = vunpack.c.l.b16 %v2186
      %v2223 = vunpack.c.h.b16 %v2186
      %v2224 = vunpack.c.l.b16 %v2187
      %v2225 = vunpack.c.h.b16 %v2187
      %v2226 = vunpack.c.l.b16 %v2188
      %v2227 = vunpack.c.h.b16 %v2188
      %v2228 = vunpack.c.l.b16 %v2189
      %v2229 = vunpack.c.h.b16 %v2189
      %v2230 = vunpack.c.l.b16 %v2190
      %v2231 = vunpack.c.h.b16 %v2190
      %v2232 = vunpack.c.l.b16 %v2191
      %v2233 = vunpack.c.h.b16 %v2191
      %v2234 = vunpack.c.l.b16 %v2192
      %v2235 = vunpack.c.h.b16 %v2192
      %v2236 = vunpack.c.l.b16 %v2193
      %v2237 = vunpack.c.h.b16 %v2193
      %v2238 = vunpack.c.l.b16 %v2194
      %v2239 = vunpack.c.h.b16 %v2194
      %v2240 = vunpack.c.l.b16 %v2195
      %v2241 = vunpack.c.h.b16 %v2195
      %v2242 = vunpack.c.l.b16 %v2196
      %v2243 = vunpack.c.h.b16 %v2196
      %v2244 = vunpack.c.l.b16 %v2197
      %v2245 = vunpack.c.h.b16 %v2197
      %v2246 = vpack.c.b16 %v2218, %v2214
      %v2247 = vpack.c.b16 %v2219, %v2215
      %v2248 = vpack.c.b16 %v2220, %v2216
      %v2249 = vpack.c.b16 %v2221, %v2217
      %v2250 = vpack.c.b16 %v2226, %v2222
      %v2251 = vpack.c.b16 %v2227, %v2223
      %v2252 = vpack.c.b16 %v2228, %v2224
      %v2253 = vpack.c.b16 %v2229, %v2225
      %v2254 = vpack.c.b16 %v2234, %v2230
      %v2255 = vpack.c.b16 %v2235, %v2231
      %v2256 = vpack.c.b16 %v2236, %v2232
      %v2257 = vpack.c.b16 %v2237, %v2233
      %v2258 = vpack.c.b16 %v2242, %v2238
      %v2259 = vpack.c.b16 %v2243, %v2239
      %v2260 = vpack.c.b16 %v2244, %v2240
      %v2261 = vpack.c.b16 %v2245, %v2241
      %vm2278 = vcmask 523264
      %v2280 = vsel %vm2278, %v2181, 0
      %2282 = vmatpush.bf16.msra.mxu0 0
      %2283 = vmatpush.bf16.msra.mxu0 0
      %2284 = vmatpush.bf16.msra.mxu0 0
      %2285 = vmatpush.bf16.msra.mxu0 0
      %2286 = vmatpush.bf16.msra.mxu0 %v2258
      %2287 = vmatpush.bf16.msra.mxu0 %v2254
      %2288 = vmatpush.bf16.msra.mxu0 %v2250
      %2289 = vmatpush.bf16.msra.mxu0 %v2246
      %2290 = vmatmul.bf16.gmra.mxu0 %v2280
      %v2291 = vpop.f32.mrf.mxu0
      %v2292 = vadd.f32 0.0, %v2291
      %v2293 = vpop.f32.mrf.mxu0
      %2294 = vdwg.mxu0
      %2295 = vmatpush.bf16.msra.mxu0 0
      %2296 = vmatpush.bf16.msra.mxu0 0
      %2297 = vmatpush.bf16.msra.mxu0 0
      %2298 = vmatpush.bf16.msra.mxu0 0
      %2299 = vmatpush.bf16.msra.mxu0 %v2259
      %2300 = vmatpush.bf16.msra.mxu0 %v2255
      %2301 = vmatpush.bf16.msra.mxu0 %v2251
      %2302 = vmatpush.bf16.msra.mxu0 %v2247
      %2303 = vmatmul.bf16.gmra.mxu0 %v2280
      %v2304 = vpop.f32.mrf.mxu0
      %v2305 = vadd.f32 0.0, %v2304
      %v2306 = vpop.f32.mrf.mxu0
      %2307 = vdwg.mxu0
      %2308 = vmatpush.bf16.msra.mxu0 0
      %2309 = vmatpush.bf16.msra.mxu0 0
      %2310 = vmatpush.bf16.msra.mxu0 0
      %2311 = vmatpush.bf16.msra.mxu0 0
      %2312 = vmatpush.bf16.msra.mxu0 %v2260
      %2313 = vmatpush.bf16.msra.mxu0 %v2256
      %2314 = vmatpush.bf16.msra.mxu0 %v2252
      %2315 = vmatpush.bf16.msra.mxu0 %v2248
      %2316 = vmatmul.bf16.gmra.mxu0 %v2280
      %v2317 = vpop.f32.mrf.mxu0
      %v2318 = vadd.f32 0.0, %v2317
      %v2319 = vpop.f32.mrf.mxu0
      %2320 = vdwg.mxu0
      %2321 = vmatpush.bf16.msra.mxu0 0
      %2322 = vmatpush.bf16.msra.mxu0 0
      %2323 = vmatpush.bf16.msra.mxu0 0
      %2324 = vmatpush.bf16.msra.mxu0 0
      %2325 = vmatpush.bf16.msra.mxu0 %v2261
      %2326 = vmatpush.bf16.msra.mxu0 %v2257
      %2327 = vmatpush.bf16.msra.mxu0 %v2253
      %2328 = vmatpush.bf16.msra.mxu0 %v2249
      %2329 = vmatmul.bf16.gmra.mxu0 %v2280
      %v2330 = vpop.f32.mrf.mxu0
      %v2331 = vadd.f32 0.0, %v2330
      %v2332 = vpop.f32.mrf.mxu0
      %2333 = vdwg.mxu0
      %2335 = vrot.lane.b32.xlu0 %v2292, 112
      %v2336 = vpop.permute.xlu0 %2335
      %2338 = vrot.lane.b32.xlu0 %v2292, 96
      %v2339 = vpop.permute.xlu0 %2338
      %2341 = vrot.lane.b32.xlu0 %v2292, 80
      %v2342 = vpop.permute.xlu0 %2341
      %2344 = vrot.lane.b32.xlu0 %v2292, 64
      %v2345 = vpop.permute.xlu0 %2344
      %2347 = vrot.lane.b32.xlu0 %v2292, 48
      %v2348 = vpop.permute.xlu0 %2347
      %2350 = vrot.lane.b32.xlu0 %v2292, 32
      %v2351 = vpop.permute.xlu0 %2350
      %2353 = vrot.lane.b32.xlu0 %v2292, 16
      %v2354 = vpop.permute.xlu0 %2353
      %2357 = vrot.lane.b32.xlu0 %v2305, 112
      %v2358 = vpop.permute.xlu0 %2357
      %2360 = vrot.lane.b32.xlu0 %v2305, 96
      %v2361 = vpop.permute.xlu0 %2360
      %2363 = vrot.lane.b32.xlu0 %v2305, 80
      %v2364 = vpop.permute.xlu0 %2363
      %2366 = vrot.lane.b32.xlu0 %v2305, 64
      %v2367 = vpop.permute.xlu0 %2366
      %2369 = vrot.lane.b32.xlu0 %v2305, 48
      %v2370 = vpop.permute.xlu0 %2369
      %2372 = vrot.lane.b32.xlu0 %v2305, 32
      %v2373 = vpop.permute.xlu0 %2372
      %2375 = vrot.lane.b32.xlu0 %v2305, 16
      %v2376 = vpop.permute.xlu0 %2375
      %2379 = vrot.lane.b32.xlu0 %v2318, 112
      %v2380 = vpop.permute.xlu0 %2379
      %2382 = vrot.lane.b32.xlu0 %v2318, 96
      %v2383 = vpop.permute.xlu0 %2382
      %2385 = vrot.lane.b32.xlu0 %v2318, 80
      %v2386 = vpop.permute.xlu0 %2385
      %2388 = vrot.lane.b32.xlu0 %v2318, 64
      %v2389 = vpop.permute.xlu0 %2388
      %2391 = vrot.lane.b32.xlu0 %v2318, 48
      %v2392 = vpop.permute.xlu0 %2391
      %2394 = vrot.lane.b32.xlu0 %v2318, 32
      %v2395 = vpop.permute.xlu0 %2394
      %2397 = vrot.lane.b32.xlu0 %v2318, 16
      %v2398 = vpop.permute.xlu0 %2397
      %v2400 = vpack.c.bf16 %v2336, %v2292
      %v2401 = vpack.c.bf16 %v2342, %v2339
      %v2402 = vpack.c.bf16 %v2348, %v2345
      %v2403 = vpack.c.bf16 %v2354, %v2351
      %v2404 = vpack.c.bf16 %v2358, %v2305
      %v2405 = vpack.c.bf16 %v2364, %v2361
      %v2406 = vpack.c.bf16 %v2370, %v2367
      %v2407 = vpack.c.bf16 %v2376, %v2373
      %v2408 = vpack.c.bf16 %v2380, %v2318
      %v2409 = vpack.c.bf16 %v2386, %v2383
      %v2410 = vpack.c.bf16 %v2392, %v2389
      %v2411 = vpack.c.bf16 %v2398, %v2395
      %v2412 = vpack.c.bf16 %v2331, %v2331
      %v2413 = vld [vmem:[%s5] sm:$0xff]
      %v2414 = vld [vmem:[%s5 + $0x8] sm:$0xff]
      %v2415 = vld [vmem:[%s6] sm:$0xff]
      %v2416 = vld [vmem:[%s6 + $0x8] sm:$0xff]
      %2418 = vset.pattern.permute.xlu0 0
      %2419 = vperm.xlu0 %2418, %v2415
      %v2420 = vpop.permute.xlu0 %2419
      %2423 = vset.pattern.permute.xlu0 0
      %2424 = vperm.xlu0 %2423, %v2416
      %v2425 = vpop.permute.xlu0 %2424
      %v2429 = vunpack.c.l.b16 %v2413
      %v2430 = vunpack.c.h.b16 %v2413
      %v2431 = vunpack.c.l.b16 %v2414
      %v2432 = vunpack.c.h.b16 %v2414
      %v2433 = vpack.c.b16 %v2431, %v2429
      %v2434 = vpack.c.b16 %v2432, %v2430
      %vm2436 = vcmask 588800
      %v2438 = vsel %vm2436, %v2434, 0
      %v2441 = vsel %vm2096, %v2412, 0
      %2443 = vmatpush.bf16.msra.mxu0 %v2407
      %2444 = vmatpush.bf16.msra.mxu0 %v2406
      %2445 = vmatpush.bf16.msra.mxu0 %v2405
      %2446 = vmatpush.bf16.msra.mxu0 %v2404
      %2447 = vmatpush.bf16.msra.mxu0 %v2403
      %2448 = vmatpush.bf16.msra.mxu0 %v2402
      %2449 = vmatpush.bf16.msra.mxu0 %v2401
      %2450 = vmatpush.bf16.msra.mxu0 %v2400
      %2451 = vmatmul.bf16.gmra.mxu0 %v2433
      %v2452 = vpop.f32.mrf.mxu0
      %v2453 = vadd.f32 %v2420, %v2452
      %v2454 = vpop.f32.mrf.mxu0
      %v2455 = vadd.f32 %v2425, %v2454
      %2456 = vdwg.mxu0
      %2457 = vmatpush.bf16.msra.mxu0 0
      %2458 = vmatpush.bf16.msra.mxu0 0
      %2459 = vmatpush.bf16.msra.mxu0 0
      %2460 = vmatpush.bf16.msra.mxu0 %v2441
      %2461 = vmatpush.bf16.msra.mxu0 %v2411
      %2462 = vmatpush.bf16.msra.mxu0 %v2410
      %2463 = vmatpush.bf16.msra.mxu0 %v2409
      %2464 = vmatpush.bf16.msra.mxu0 %v2408
      %2465 = vmatmul.bf16.gmra.mxu0 %v2438
      %v2466 = vpop.f32.mrf.mxu0
      %v2467 = vadd.f32 %v2453, %v2466
      %v2468 = vpop.f32.mrf.mxu0
      %v2469 = vadd.f32 %v2455, %v2468
      %2470 = vdwg.mxu0
      %vm2471 = vcmp.gt.f32.partialorder %v2467, 0.0
      %vm2472 = vcmp.gt.f32.partialorder %v2469, 0.0
      %v2473 = vmul.f32 %v2467, 0.2
      %v2474 = vmul.f32 %v2469, 0.2
      %v2475 = vsel %vm2471, %v2467, %v2473
      %v2476 = vsel %vm2472, %v2469, %v2474
      %v2477 = vpack.c.bf16 %v2476, %v2475
      %v2478 = vld [vmem:[%s7] sm:$0xf]
      %v2479 = vld [vmem:[%s7 + $0x4] sm:$0xf]
      %v2482 = vunpack.c.l.b16 %v2478
      %v2483 = vunpack.c.l.b16 %v2479
      %v2484 = vpack.c.b16 %v2483, %v2482
      %vm2486 = vcmask 130048
      %v2488 = vsel %vm2486, %v2477, 0
      %2490 = vmatpush.bf16.msra.mxu0 0
      %2491 = vmatpush.bf16.msra.mxu0 0
      %2492 = vmatpush.bf16.msra.mxu0 0
      %2493 = vmatpush.bf16.msra.mxu0 0
      %2494 = vmatpush.bf16.msra.mxu0 0
      %2495 = vmatpush.bf16.msra.mxu0 0
      %2496 = vmatpush.bf16.msra.mxu0 0
      %2497 = vmatpush.bf16.msra.mxu0 %v2484
      %2498 = vmatmul.bf16.gmra.mxu0 %v2488
      %v2499 = vpop.f32.mrf.mxu0
      %v2500 = vadd.f32 0.0, %v2499
      %v2501 = vpop.f32.mrf.mxu0
      %v2502 = vadd.f32 0.0, %v2501
      %2503 = vdwg.mxu0
      %2506 = vrot.lane.b32.xlu0 %v2500, 124
      %v2507 = vpop.permute.xlu0 %2506
      %2508 = vrot.lane.b32.xlu0 %v2502, 124
      %v2509 = vpop.permute.xlu0 %2508
      %2512 = vrot.lane.b32.xlu0 %v2500, 120
      %v2513 = vpop.permute.xlu0 %2512
      %2514 = vrot.lane.b32.xlu0 %v2502, 120
      %v2515 = vpop.permute.xlu0 %2514
      %2518 = vrot.lane.b32.xlu0 %v2500, 116
      %v2519 = vpop.permute.xlu0 %2518
      %2520 = vrot.lane.b32.xlu0 %v2502, 116
      %v2521 = vpop.permute.xlu0 %2520
      %2524 = vrot.lane.b32.xlu0 %v2500, 112
      %v2525 = vpop.permute.xlu0 %2524
      %2526 = vrot.lane.b32.xlu0 %v2502, 112
      %v2527 = vpop.permute.xlu0 %2526
      %2530 = vrot.lane.b32.xlu0 %v2500, 108
      %v2531 = vpop.permute.xlu0 %2530
      %2532 = vrot.lane.b32.xlu0 %v2502, 108
      %v2533 = vpop.permute.xlu0 %2532
      %2536 = vrot.lane.b32.xlu0 %v2500, 104
      %v2537 = vpop.permute.xlu0 %2536
      %2538 = vrot.lane.b32.xlu0 %v2502, 104
      %v2539 = vpop.permute.xlu0 %2538
      %2542 = vrot.lane.b32.xlu0 %v2500, 100
      %v2543 = vpop.permute.xlu0 %2542
      %2544 = vrot.lane.b32.xlu0 %v2502, 100
      %v2545 = vpop.permute.xlu0 %2544
      %2548 = vrot.lane.b32.xlu0 %v2500, 96
      %v2549 = vpop.permute.xlu0 %2548
      %2550 = vrot.lane.b32.xlu0 %v2502, 96
      %v2551 = vpop.permute.xlu0 %2550
      %2554 = vrot.lane.b32.xlu0 %v2500, 92
      %v2555 = vpop.permute.xlu0 %2554
      %2556 = vrot.lane.b32.xlu0 %v2502, 92
      %v2557 = vpop.permute.xlu0 %2556
      %2560 = vrot.lane.b32.xlu0 %v2500, 88
      %v2561 = vpop.permute.xlu0 %2560
      %2562 = vrot.lane.b32.xlu0 %v2502, 88
      %v2563 = vpop.permute.xlu0 %2562
      %2566 = vrot.lane.b32.xlu0 %v2500, 84
      %v2567 = vpop.permute.xlu0 %2566
      %2568 = vrot.lane.b32.xlu0 %v2502, 84
      %v2569 = vpop.permute.xlu0 %2568
      %2572 = vrot.lane.b32.xlu0 %v2500, 80
      %v2573 = vpop.permute.xlu0 %2572
      %2574 = vrot.lane.b32.xlu0 %v2502, 80
      %v2575 = vpop.permute.xlu0 %2574
      %2578 = vrot.lane.b32.xlu0 %v2500, 76
      %v2579 = vpop.permute.xlu0 %2578
      %2580 = vrot.lane.b32.xlu0 %v2502, 76
      %v2581 = vpop.permute.xlu0 %2580
      %2584 = vrot.lane.b32.xlu0 %v2500, 72
      %v2585 = vpop.permute.xlu0 %2584
      %2586 = vrot.lane.b32.xlu0 %v2502, 72
      %v2587 = vpop.permute.xlu0 %2586
      %2590 = vrot.lane.b32.xlu0 %v2500, 68
      %v2591 = vpop.permute.xlu0 %2590
      %2592 = vrot.lane.b32.xlu0 %v2502, 68
      %v2593 = vpop.permute.xlu0 %2592
      %2596 = vrot.lane.b32.xlu0 %v2500, 64
      %v2597 = vpop.permute.xlu0 %2596
      %2598 = vrot.lane.b32.xlu0 %v2502, 64
      %v2599 = vpop.permute.xlu0 %2598
      %2600 = vrot.lane.b32.xlu0 %v2507, 64
      %v2601 = vpop.permute.xlu0 %2600
      %2602 = vrot.lane.b32.xlu0 %v2509, 64
      %v2603 = vpop.permute.xlu0 %2602
      %2604 = vrot.lane.b32.xlu0 %v2513, 64
      %v2605 = vpop.permute.xlu0 %2604
      %2606 = vrot.lane.b32.xlu0 %v2515, 64
      %v2607 = vpop.permute.xlu0 %2606
      %2608 = vrot.lane.b32.xlu0 %v2519, 64
      %v2609 = vpop.permute.xlu0 %2608
      %2610 = vrot.lane.b32.xlu0 %v2521, 64
      %v2611 = vpop.permute.xlu0 %2610
      %2612 = vrot.lane.b32.xlu0 %v2525, 64
      %v2613 = vpop.permute.xlu0 %2612
      %2614 = vrot.lane.b32.xlu0 %v2527, 64
      %v2615 = vpop.permute.xlu0 %2614
      %2616 = vrot.lane.b32.xlu0 %v2531, 64
      %v2617 = vpop.permute.xlu0 %2616
      %2618 = vrot.lane.b32.xlu0 %v2533, 64
      %v2619 = vpop.permute.xlu0 %2618
      %2620 = vrot.lane.b32.xlu0 %v2537, 64
      %v2621 = vpop.permute.xlu0 %2620
      %2622 = vrot.lane.b32.xlu0 %v2539, 64
      %v2623 = vpop.permute.xlu0 %2622
      %2624 = vrot.lane.b32.xlu0 %v2543, 64
      %v2625 = vpop.permute.xlu0 %2624
      %2626 = vrot.lane.b32.xlu0 %v2545, 64
      %v2627 = vpop.permute.xlu0 %2626
      %2628 = vrot.lane.b32.xlu0 %v2549, 64
      %v2629 = vpop.permute.xlu0 %2628
      %2630 = vrot.lane.b32.xlu0 %v2551, 64
      %v2631 = vpop.permute.xlu0 %2630
      %v2650 = vpack.c.bf16 %v2502, %v2500
      %v2651 = vpack.c.bf16 %v2509, %v2507
      %v2652 = vpack.c.bf16 %v2515, %v2513
      %v2653 = vpack.c.bf16 %v2521, %v2519
      %v2654 = vpack.c.bf16 %v2527, %v2525
      %v2655 = vpack.c.bf16 %v2533, %v2531
      %v2656 = vpack.c.bf16 %v2539, %v2537
      %v2657 = vpack.c.bf16 %v2545, %v2543
      %v2658 = vpack.c.bf16 %v2551, %v2549
      %v2659 = vpack.c.bf16 %v2557, %v2555
      %v2660 = vpack.c.bf16 %v2563, %v2561
      %v2661 = vpack.c.bf16 %v2569, %v2567
      %v2662 = vpack.c.bf16 %v2575, %v2573
      %v2663 = vpack.c.bf16 %v2581, %v2579
      %v2664 = vpack.c.bf16 %v2587, %v2585
      %v2665 = vpack.c.bf16 %v2593, %v2591
      %v2666 = vpack.c.bf16 %v2599, %v2597
      %v2667 = vpack.c.bf16 %v2603, %v2601
      %v2668 = vpack.c.bf16 %v2607, %v2605
      %v2669 = vpack.c.bf16 %v2611, %v2609
      %v2670 = vpack.c.bf16 %v2615, %v2613
      %v2671 = vpack.c.bf16 %v2619, %v2617
      %v2672 = vpack.c.bf16 %v2623, %v2621
      %v2673 = vpack.c.bf16 %v2627, %v2625
      %v2674 = vpack.c.bf16 %v2631, %v2629
      %v2675 = vld [vmem:[%s8] sm:$0xff]
      %v2676 = vld [vmem:[%s8 + $0x8] sm:$0xff]
      %v2677 = vld [vmem:[%s8 + $0x10] sm:$0xff]
      %v2678 = vld [vmem:[%s8 + $0x18] sm:$0xff]
      %v2679 = vld [vmem:[%s8 + $0x20] sm:$0xff]
      %v2680 = vld [vmem:[%s8 + $0x28] sm:$0xff]
      %v2681 = vld [vmem:[%s8 + $0x30] sm:$0xff]
      %v2682 = vld [vmem:[%s8 + $0x38] sm:$0xff]
      %v2683 = vld [vmem:[%s9] sm:$0xff]
      %v2684 = vld [vmem:[%s9 + $0x8] sm:$0xff]
      %v2685 = vld [vmem:[%s9 + $0x10] sm:$0xff]
      %v2686 = vld [vmem:[%s9 + $0x18] sm:$0xff]
      %2688 = vset.pattern.permute.xlu0 0
      %2689 = vperm.xlu0 %2688, %v2683
      %v2690 = vpop.permute.xlu0 %2689
      %2693 = vset.pattern.permute.xlu0 0
      %2694 = vperm.xlu0 %2693, %v2684
      %v2695 = vpop.permute.xlu0 %2694
      %2698 = vset.pattern.permute.xlu0 0
      %2699 = vperm.xlu0 %2698, %v2685
      %v2700 = vpop.permute.xlu0 %2699
      %2703 = vset.pattern.permute.xlu0 0
      %2704 = vperm.xlu0 %2703, %v2686
      %v2705 = vpop.permute.xlu0 %2704
      %v2715 = vunpack.c.l.b16 %v2675
      %v2716 = vunpack.c.h.b16 %v2675
      %v2717 = vunpack.c.l.b16 %v2676
      %v2718 = vunpack.c.h.b16 %v2676
      %v2719 = vunpack.c.l.b16 %v2677
      %v2720 = vunpack.c.h.b16 %v2677
      %v2721 = vunpack.c.l.b16 %v2678
      %v2722 = vunpack.c.h.b16 %v2678
      %v2723 = vunpack.c.l.b16 %v2679
      %v2724 = vunpack.c.h.b16 %v2679
      %v2725 = vunpack.c.l.b16 %v2680
      %v2726 = vunpack.c.h.b16 %v2680
      %v2727 = vunpack.c.l.b16 %v2681
      %v2728 = vunpack.c.h.b16 %v2681
      %v2729 = vunpack.c.l.b16 %v2682
      %v2730 = vunpack.c.h.b16 %v2682
      %v2731 = vpack.c.b16 %v2719, %v2715
      %v2732 = vpack.c.b16 %v2720, %v2716
      %v2733 = vpack.c.b16 %v2721, %v2717
      %v2734 = vpack.c.b16 %v2722, %v2718
      %v2735 = vpack.c.b16 %v2727, %v2723
      %v2736 = vpack.c.b16 %v2728, %v2724
      %v2737 = vpack.c.b16 %v2729, %v2725
      %v2738 = vpack.c.b16 %v2730, %v2726
      %v2746 = vsel %vm2486, %v2734, 0
      %v2749 = vsel %vm2486, %v2738, 0
      %2751 = vmatpush.bf16.msra.mxu0 %v2657
      %2752 = vmatpush.bf16.msra.mxu0 %v2656
      %2753 = vmatpush.bf16.msra.mxu0 %v2655
      %2754 = vmatpush.bf16.msra.mxu0 %v2654
      %2755 = vmatpush.bf16.msra.mxu0 %v2653
      %2756 = vmatpush.bf16.msra.mxu0 %v2652
      %2757 = vmatpush.bf16.msra.mxu0 %v2651
      %2758 = vmatpush.bf16.msra.mxu0 %v2650
      %2759 = vmatmul.bf16.gmra.mxu0 %v2731
      %v2760 = vpop.f32.mrf.mxu0
      %v2761 = vadd.f32 %v2690, %v2760
      %v2762 = vpop.f32.mrf.mxu0
      %v2763 = vadd.f32 %v2695, %v2762
      %2764 = vmatmul.bf16.gmra.mxu0 %v2735
      %v2765 = vpop.f32.mrf.mxu0
      %v2766 = vadd.f32 %v2700, %v2765
      %v2767 = vpop.f32.mrf.mxu0
      %v2768 = vadd.f32 %v2705, %v2767
      %2769 = vdwg.mxu0
      %2770 = vmatpush.bf16.msra.mxu0 %v2665
      %2771 = vmatpush.bf16.msra.mxu0 %v2664
      %2772 = vmatpush.bf16.msra.mxu0 %v2663
      %2773 = vmatpush.bf16.msra.mxu0 %v2662
      %2774 = vmatpush.bf16.msra.mxu0 %v2661
      %2775 = vmatpush.bf16.msra.mxu0 %v2660
      %2776 = vmatpush.bf16.msra.mxu0 %v2659
      %2777 = vmatpush.bf16.msra.mxu0 %v2658
      %2778 = vmatmul.bf16.gmra.mxu0 %v2732
      %v2779 = vpop.f32.mrf.mxu0
      %v2780 = vadd.f32 %v2761, %v2779
      %v2781 = vpop.f32.mrf.mxu0
      %v2782 = vadd.f32 %v2763, %v2781
      %2783 = vmatmul.bf16.gmra.mxu0 %v2736
      %v2784 = vpop.f32.mrf.mxu0
      %v2785 = vadd.f32 %v2766, %v2784
      %v2786 = vpop.f32.mrf.mxu0
      %v2787 = vadd.f32 %v2768, %v2786
      %2788 = vdwg.mxu0
      %2789 = vmatpush.bf16.msra.mxu0 %v2673
      %2790 = vmatpush.bf16.msra.mxu0 %v2672
      %2791 = vmatpush.bf16.msra.mxu0 %v2671
      %2792 = vmatpush.bf16.msra.mxu0 %v2670
      %2793 = vmatpush.bf16.msra.mxu0 %v2669
      %2794 = vmatpush.bf16.msra.mxu0 %v2668
      %2795 = vmatpush.bf16.msra.mxu0 %v2667
      %2796 = vmatpush.bf16.msra.mxu0 %v2666
      %2797 = vmatmul.bf16.gmra.mxu0 %v2733
      %v2798 = vpop.f32.mrf.mxu0
      %v2799 = vadd.f32 %v2780, %v2798
      %v2800 = vpop.f32.mrf.mxu0
      %v2801 = vadd.f32 %v2782, %v2800
      %2802 = vmatmul.bf16.gmra.mxu0 %v2737
      %v2803 = vpop.f32.mrf.mxu0
      %v2804 = vadd.f32 %v2785, %v2803
      %v2805 = vpop.f32.mrf.mxu0
      %v2806 = vadd.f32 %v2787, %v2805
      %2807 = vdwg.mxu0
      %2808 = vmatpush.bf16.msra.mxu0 0
      %2809 = vmatpush.bf16.msra.mxu0 0
      %2810 = vmatpush.bf16.msra.mxu0 0
      %2811 = vmatpush.bf16.msra.mxu0 0
      %2812 = vmatpush.bf16.msra.mxu0 0
      %2813 = vmatpush.bf16.msra.mxu0 0
      %2814 = vmatpush.bf16.msra.mxu0 0
      %2815 = vmatpush.bf16.msra.mxu0 %v2674
      %2816 = vmatmul.bf16.gmra.mxu0 %v2746
      %v2817 = vpop.f32.mrf.mxu0
      %v2818 = vadd.f32 %v2799, %v2817
      %v2819 = vpop.f32.mrf.mxu0
      %v2820 = vadd.f32 %v2801, %v2819
      %2821 = vmatmul.bf16.gmra.mxu0 %v2749
      %v2822 = vpop.f32.mrf.mxu0
      %v2823 = vadd.f32 %v2804, %v2822
      %v2824 = vpop.f32.mrf.mxu0
      %v2825 = vadd.f32 %v2806, %v2824
      %2826 = vdwg.mxu0
      %vm2827 = vcmp.gt.f32.partialorder %v2818, 0.0
      %vm2828 = vcmp.gt.f32.partialorder %v2820, 0.0
      %vm2829 = vcmp.gt.f32.partialorder %v2823, 0.0
      %vm2830 = vcmp.gt.f32.partialorder %v2825, 0.0
      %v2831 = vmul.f32 %v2818, 0.2
      %v2832 = vmul.f32 %v2820, 0.2
      %v2833 = vmul.f32 %v2823, 0.2
      %v2834 = vmul.f32 %v2825, 0.2
      %v2835 = vsel %vm2827, %v2818, %v2831
      %v2836 = vsel %vm2828, %v2820, %v2832
      %v2837 = vsel %vm2829, %v2823, %v2833
      %v2838 = vsel %vm2830, %v2825, %v2834
      %v2839 = vld [vmem:[%s10] sm:$0xff]
      %v2840 = vld [vmem:[%s10 + $0x8] sm:$0xff]
      %v2841 = vld [vmem:[%s10 + $0x10] sm:$0xff]
      %v2842 = vld [vmem:[%s10 + $0x18] sm:$0xff]
      %v2843 = vmul.f32 %v2835, %v2839
      %v2844 = vmul.f32 %v2836, %v2840
      %v2845 = vmul.f32 %v2837, %v2841
      %v2846 = vmul.f32 %v2838, %v2842
      %vm2847 = vcmask 31744
      %v2848 = vsel %vm2847, %v2843, 0.0
      %v2849 = vsel %vm2847, %v2844, 0.0
      %v2850 = vadd.f32 %v2848, %v2849
      %v2851 = vsel %vm2847, %v2845, 0.0
      %v2852 = vadd.f32 %v2850, %v2851
      %v2853 = vsel %vm2847, %v2846, 0.0
      %v2854 = vadd.f32 %v2852, %v2853
      %2855 = vadd.xlane.f32.xlu0 %v2854
      %v2856 = vpop.xlane.xlu0 %2855
      %v2857 = vrot.slane %v2856, 4
      %v2858 = vadd.f32 %v2856, %v2857
      %v2859 = vrot.slane %v2858, 2
      %v2860 = vadd.f32 %v2858, %v2859
      %v2861 = vrot.slane %v2860, 1
      %v2862 = vadd.f32 %v2860, %v2861
      %s2863 = vtos %v2862
      %v2864 = vstv %s2863
      %v2865 = vld [vmem:[#allocation2] sm:$0x1]
      %v2866 = vadd.f32 %v2864, %v2865
      %2868 = vset.pattern.permute.xlu0 0
      %2869 = vperm.xlu0 %2868, %v2866
      %v2870 = vpop.permute.xlu0 %2869
      %v2872 = vperm.slane %v2870, 0
      %v2873 = vadd.f32 %v2872, 0.0
      %2874 = vst [vmem:[%s411] sm:$0x1] %v2873
      %p2875 = scmp.lt.s32.totalorder %s25, 1
      %s2876 = scalar_select %p2875, %s25, 1
      %s2877 = scalar_lea.vmem %s12, %s2876
      // Predicated region
      $region69: #{discriminator_forward.1} parent=67 // pred_check
        %p2878 = pneg %p300
      $region70: #{discriminator_forward.1} parent=67 // pred_check_branch
        %2880 = sbr.rel (%p2878) target = $region72
      $region71: #{discriminator_forward.1} parent=67 // pred_region
        _
      $region72: #{discriminator_forward.1} parent=67 // pred_fallthru
        _
    $region68: #{discriminator_forward.1} parent=5 // pred_fallthru
      _
    %p2881 = scmp.le.s32.totalorder 2, %s20
    // Predicated region
    $region73: #{discriminator_forward.1} parent=5 // pred_check
      %p2882 = pneg %p2881
    $region74: #{discriminator_forward.1} parent=5 // pred_check_branch
      %2884 = sbr.rel (%p2882) target = $region76
    $region75: #{discriminator_forward.1} parent=5 // pred_region
      %s2885 = ssub.s32 %s20, 2
      // Predicated region
      $region77: #{discriminator_forward.1} parent=75 // pred_check
        %p2886 = pneg %p306
      $region78: #{discriminator_forward.1} parent=75 // pred_check_branch
        %2888 = sbr.rel (%p2886) target = $region80
      $region79: #{discriminator_forward.1} parent=75 // pred_region
        %p2889 = scmp.lt.s32.totalorder %s26, 1
        %s2890 = scalar_select %p2889, %s26, 1
        %s2891 = scalar_lea.vmem %s12, %s2890
      $region80: #{discriminator_forward.1} parent=75 // pred_fallthru
        _
    $region76: #{discriminator_forward.1} parent=5 // pred_fallthru
      _
  $region6: #{discriminator_forward.1} parent=0 // loop_footer
    %s24 = sadd.s32 1, %s20
  $region7: #{discriminator_forward.1} parent=0 // loop_footer_branch
    %19 = sbr.rel target = $region3
  $region8: #{discriminator_forward.1} parent=0 // loop_exit
    _

</llo_original>
